<compile_context>
chip_gen: v7x
topology: tpu7x:2x2x1
jax: 0.10.0
libtpu: 0.0.40
codegen_flags: <defaults>
</compile_context>

<pallas_src>
import functools

import jax
import jax.numpy as jnp
from jax.experimental import pallas as pl
from jax.experimental.pallas import tpu as pltpu

KSIZE = 3  # Conv1d kernel size assumed in ConvBlock


def _cnn_kernel(n_layers, seq_len, chunk_b, x_ref, *refs):
    """Fused forward for one batch chunk (chunk_b batch elements).

    refs = [w_0, b_0, ..., w_{L-1}, b_{L-1}, w_fc, b_fc, mask, gsel, out_ref]

      x_ref   : (1, rows, c_in)   rows = chunk_b*(seq_len+2); pad rows are zero
      w_l     : (3, c_in_l, U)    conv weight, tap-major
      b_l     : (1, U)
      w_fc    : (seq_len, U, D)   FC weight, blocked by time position
      b_fc    : (1, D)
      mask    : (rows, 1)         1.0 on valid rows, 0.0 on pad rows
      gsel    : (chunk_b*seq_len, rows)  0/1 row-selection matrix
                gsel[t*chunk_b + b, r] = 1  iff  r == b*(seq_len+2) + t + 1
      out_ref : (1, chunk_b, D)
    """
    conv_refs = refs[: 2 * n_layers]
    w_fc_ref, b_fc_ref, mask_ref, gsel_ref, out_ref = refs[2 * n_layers:]

    mask = mask_ref[...]            # (rows, 1), broadcasts over lanes
    cur = x_ref[0]                  # (rows, c_in); pad rows are zero

    # --- Conv stack: per-tap accumulation, 3 small matmuls per layer ----------
    for l in range(n_layers):
        w_ref = conv_refs[2 * l]        # (3, c_in_l, U)
        b_ref = conv_refs[2 * l + 1]    # (1, U)
        c = cur.shape[-1]
        zrow = jnp.zeros((1, c), dtype=cur.dtype)
        # Tap k needs row (r - 1 + k).  Pad rows are zero, so the edge fill and
        # the batch-boundary rows (which are masked below) stay exact.
        prev_tap = jnp.concatenate([zrow, cur[:-1, :]], axis=0)   # row r-1
        next_tap = jnp.concatenate([cur[1:, :], zrow], axis=0)    # row r+1
        y = jnp.dot(prev_tap, w_ref[0], preferred_element_type=jnp.float32)
        y = y + jnp.dot(cur, w_ref[1], preferred_element_type=jnp.float32)
        y = y + jnp.dot(next_tap, w_ref[2], preferred_element_type=jnp.float32)
        y = y + b_ref[...]
        # ReLU, then re-zero pad rows so the next layer's taps stay clean.
        cur = mask * jnp.maximum(y, 0.0)

    # --- Flatten + Linear -----------------------------------------------------
    # out[b, d] = sum_t sum_u act[b, t, u] * w_fc[t, u, d] + b_fc[d]
    # Step 1: one selection matmul reorders valid rows to time-major order:
    #   gathered[t*chunk_b + b, :] = act[b, t, :]
    gathered = jnp.dot(gsel_ref[...], cur, preferred_element_type=jnp.float32)
    # Step 2: contract channels per timestep and accumulate (L small matmuls;
    # static contiguous row slices, no reshape / relayout needed).
    d_out = out_ref.shape[-1]
    acc = jnp.zeros((chunk_b, d_out), dtype=jnp.float32)
    for t in range(seq_len):
        blk = gathered[t * chunk_b:(t + 1) * chunk_b, :]          # (chunk_b, U)
        acc = acc + jnp.dot(blk, w_fc_ref[t],
                            preferred_element_type=jnp.float32)   # (chunk_b, D)
    out_ref[0] = acc + b_fc_ref[...]


def cnn_forward(x_ncl, conv_ws, conv_bs, w_fc, b_fc, *,
                pred_len, n_features_out, batch_chunk=1):
    """x_ncl: (B, n_features_in, seq_len) float32 (PyTorch NCL convention)."""
    B, c_in, L = x_ncl.shape
    n_layers = len(conv_ws)
    D = pred_len * n_features_out
    Lp = L + 2                          # padded length per batch element

    if B % batch_chunk != 0:
        batch_chunk = 1
    n_chunks = B // batch_chunk
    rows = batch_chunk * Lp             # slab rows per chunk

    # --- host-side re-layout (cheap XLA ops, outside the kernel) -------------
    x_nlc = jnp.transpose(x_ncl, (0, 2, 1))                       # (B, L, C)
    x_slab = jnp.pad(x_nlc, ((0, 0), (1, 1), (0, 0))).reshape(n_chunks, rows, c_in)

    # Tiny per-chunk selector constants (a few hundred bytes total).
    pos = jnp.arange(rows) % Lp
    mask_rows = ((pos >= 1) & (pos <= L)).astype(jnp.float32)[:, None]   # (rows,1)

    i_idx = jnp.arange(batch_chunk * L)
    src_row = (i_idx % batch_chunk) * Lp + (i_idx // batch_chunk) + 1
    gsel = (src_row[:, None] == jnp.arange(rows)[None, :]).astype(jnp.float32)

    args = [x_slab]
    for w, bb in zip(conv_ws, conv_bs):
        args += [w, bb]
    args += [w_fc, b_fc, mask_rows, gsel]

    # Input x / output are blocked per chunk; everything else is a full block
    # with a constant block index (stays VMEM-resident across grid steps).
    def full_spec(a):
        return pl.BlockSpec(a.shape, lambda i, _n=a.ndim: (0,) * _n)

    in_specs = [pl.BlockSpec((1, rows, c_in), lambda i: (i, 0, 0))]
    in_specs += [full_spec(a) for a in args[1:]]

    kernel = functools.partial(_cnn_kernel, n_layers, L, batch_chunk)

    out = pl.pallas_call(
        kernel,
        out_shape=jax.ShapeDtypeStruct((n_chunks, batch_chunk, D), jnp.float32),
        grid=(n_chunks,),
        in_specs=in_specs,
        out_specs=pl.BlockSpec((1, batch_chunk, D), lambda i: (i, 0, 0)),
        compiler_params=pltpu.CompilerParams(
            dimension_semantics=("parallel",),     # split chunks across TCs (v7x)
            vmem_limit_bytes=32 * 1024 * 1024,     # explicit; far above actual use
        ),
    )(*args)

    return out.reshape(B, pred_len, n_features_out)


def cnn_reference(x_ncl, conv_ws, conv_bs, w_fc, b_fc, *,
                  pred_len, n_features_out):
    """Pure-JAX reference with identical semantics (for verification)."""
    B, _, L = x_ncl.shape
    a = jnp.transpose(x_ncl, (0, 2, 1))                    # (B, L, C)
    for w, bb in zip(conv_ws, conv_bs):
        ap = jnp.pad(a, ((0, 0), (1, 1), (0, 0)))
        y = bb[None]                                       # (1, 1, U)
        for k in range(KSIZE):
            y = y + jnp.einsum('blc,cu->blu', ap[:, k:k + L, :], w[k])
        a = jnp.maximum(y, 0.0)
    out = jnp.einsum('blu,lud->bd', a, w_fc) + b_fc[0]
    return out.reshape(B, pred_len, n_features_out)


if __name__ == "__main__":
    # Hyper-parameters implied by the module's __init__.
    batch = 2
    n_features_in = 4
    n_features_out = 3
    seq_len = 8
    pred_len = 4
    n_layers = 2
    n_units = 32
    d_out = pred_len * n_features_out

    key = jax.random.PRNGKey(0)
    keys = jax.random.split(key, 2 + 2 * n_layers + 2)

    # Input in PyTorch NCL convention: (B, n_features_in, seq_len).
    x = jax.random.normal(keys[0], (batch, n_features_in, seq_len),
                          dtype=jnp.float32)

    conv_ws, conv_bs = [], []
    for l in range(n_layers):
        c_in = n_features_in if l == 0 else n_units
        w = 0.1 * jax.random.normal(keys[2 + 2 * l], (KSIZE, c_in, n_units),
                                    dtype=jnp.float32)
        b = 0.1 * jax.random.normal(keys[3 + 2 * l], (1, n_units),
                                    dtype=jnp.float32)
        conv_ws.append(w)
        conv_bs.append(b)

    w_fc = 0.1 * jax.random.normal(keys[1], (seq_len, n_units, d_out),
                                   dtype=jnp.float32)
    b_fc = 0.1 * jax.random.normal(keys[-1], (1, d_out), dtype=jnp.float32)

    out = cnn_forward(x, conv_ws, conv_bs, w_fc, b_fc,
                      pred_len=pred_len, n_features_out=n_features_out,
                      batch_chunk=1)
    out = jax.block_until_ready(out)

    ref = cnn_reference(x, conv_ws, conv_bs, w_fc, b_fc,
                        pred_len=pred_len, n_features_out=n_features_out)

    assert out.shape == (batch, pred_len, n_features_out), out.shape
    assert jnp.allclose(out, ref, rtol=1e-4, atol=1e-4), (
        f"max abs err = {jnp.max(jnp.abs(out - ref))}")

    print("KERNEL_OK")
</pallas_src>

<mosaic_0001>
module attributes {stable_mosaic.version = 11 : i64} {
  func.func @_cnn_kernel(%arg0: i32, %arg1: memref<1x10x4xf32, #tpu.memory_space<vmem>>, %arg2: memref<3x4x32xf32, #tpu.memory_space<vmem>>, %arg3: memref<1x32xf32, #tpu.memory_space<vmem>>, %arg4: memref<3x32x32xf32, #tpu.memory_space<vmem>>, %arg5: memref<1x32xf32, #tpu.memory_space<vmem>>, %arg6: memref<8x32x12xf32, #tpu.memory_space<vmem>>, %arg7: memref<1x12xf32, #tpu.memory_space<vmem>>, %arg8: memref<10x1xf32, #tpu.memory_space<vmem>>, %arg9: memref<8x10xf32, #tpu.memory_space<vmem>>, %arg10: memref<1x1x12xf32, #tpu.memory_space<vmem>>) attributes {dimension_semantics = [#tpu.dimension_semantics<parallel>], iteration_bounds = array<i64: 2>, scalar_prefetch = 0 : i64, scratch_operands = 0 : i64, tpu.core_type = #tpu.core_type<tc>, window_params = [{transform_indices = @transform_0, window_bounds = array<i64: 1, 10, 4>}, {pipeline_mode = #tpu.pipeline_mode<synchronous>, transform_indices = @transform_1, window_bounds = array<i64: 3, 4, 32>}, {pipeline_mode = #tpu.pipeline_mode<synchronous>, transform_indices = @transform_2, window_bounds = array<i64: 1, 32>}, {pipeline_mode = #tpu.pipeline_mode<synchronous>, transform_indices = @transform_3, window_bounds = array<i64: 3, 32, 32>}, {pipeline_mode = #tpu.pipeline_mode<synchronous>, transform_indices = @transform_4, window_bounds = array<i64: 1, 32>}, {pipeline_mode = #tpu.pipeline_mode<synchronous>, transform_indices = @transform_5, window_bounds = array<i64: 8, 32, 12>}, {pipeline_mode = #tpu.pipeline_mode<synchronous>, transform_indices = @transform_6, window_bounds = array<i64: 1, 12>}, {pipeline_mode = #tpu.pipeline_mode<synchronous>, transform_indices = @transform_7, window_bounds = array<i64: 10, 1>}, {pipeline_mode = #tpu.pipeline_mode<synchronous>, transform_indices = @transform_8, window_bounds = array<i64: 8, 10>}, {transform_indices = @transform_9, window_bounds = array<i64: 1, 1, 12>}]} {
    %c0 = arith.constant 0 : index
    %c0_0 = arith.constant 0 : index
    %0 = vector.load %arg8[%c0, %c0_0] : memref<10x1xf32, #tpu.memory_space<vmem>>, vector<10x1xf32>
    %c0_1 = arith.constant 0 : index
    %c0_2 = arith.constant 0 : index
    %c0_3 = arith.constant 0 : index
    %1 = vector.load %arg1[%c0_1, %c0_2, %c0_3] : memref<1x10x4xf32, #tpu.memory_space<vmem>>, vector<1x10x4xf32>
    %2 = vector.shape_cast %1 : vector<1x10x4xf32> to vector<10x4xf32>
    %cst = arith.constant 0.000000e+00 : f32
    %3 = vector.broadcast %cst : f32 to vector<1x4xf32>
    %4 = vector.extract_strided_slice %2 {offsets = [0, 0], sizes = [9, 4], strides = [1, 1]} : vector<10x4xf32> to vector<9x4xf32>
    %5 = tpu.concatenate %3, %4 in 0 : vector<1x4xf32>, vector<9x4xf32> -> vector<10x4xf32>
    %6 = vector.extract_strided_slice %2 {offsets = [1, 0], sizes = [9, 4], strides = [1, 1]} : vector<10x4xf32> to vector<9x4xf32>
    %7 = tpu.concatenate %6, %3 in 0 : vector<9x4xf32>, vector<1x4xf32> -> vector<10x4xf32>
    %c0_4 = arith.constant 0 : index
    %c0_5 = arith.constant 0 : index
    %c0_6 = arith.constant 0 : index
    %8 = vector.load %arg2[%c0_4, %c0_5, %c0_6] : memref<3x4x32xf32, #tpu.memory_space<vmem>>, vector<1x4x32xf32>
    %9 = vector.shape_cast %8 : vector<1x4x32xf32> to vector<4x32xf32>
    %cst_7 = arith.constant dense<0.000000e+00> : vector<10x32xf32>
    %10 = tpu.matmul %5, %9, %cst_7 {dimension_numbers = #tpu.dot_dimension_numbers<[1], [0], [0], [1], [0, 0, 1, 1], [], []>} : vector<10x4xf32>, vector<4x32xf32>, vector<10x32xf32> -> vector<10x32xf32>
    %c1 = arith.constant 1 : index
    %c0_8 = arith.constant 0 : index
    %c0_9 = arith.constant 0 : index
    %11 = vector.load %arg2[%c1, %c0_8, %c0_9] : memref<3x4x32xf32, #tpu.memory_space<vmem>>, vector<1x4x32xf32>
    %12 = vector.shape_cast %11 : vector<1x4x32xf32> to vector<4x32xf32>
    %cst_10 = arith.constant dense<0.000000e+00> : vector<10x32xf32>
    %13 = tpu.matmul %2, %12, %cst_10 {dimension_numbers = #tpu.dot_dimension_numbers<[1], [0], [0], [1], [0, 0, 1, 1], [], []>} : vector<10x4xf32>, vector<4x32xf32>, vector<10x32xf32> -> vector<10x32xf32>
    %14 = arith.addf %10, %13 : vector<10x32xf32>
    %c2 = arith.constant 2 : index
    %c0_11 = arith.constant 0 : index
    %c0_12 = arith.constant 0 : index
    %15 = vector.load %arg2[%c2, %c0_11, %c0_12] : memref<3x4x32xf32, #tpu.memory_space<vmem>>, vector<1x4x32xf32>
    %16 = vector.shape_cast %15 : vector<1x4x32xf32> to vector<4x32xf32>
    %cst_13 = arith.constant dense<0.000000e+00> : vector<10x32xf32>
    %17 = tpu.matmul %7, %16, %cst_13 {dimension_numbers = #tpu.dot_dimension_numbers<[1], [0], [0], [1], [0, 0, 1, 1], [], []>} : vector<10x4xf32>, vector<4x32xf32>, vector<10x32xf32> -> vector<10x32xf32>
    %18 = arith.addf %14, %17 : vector<10x32xf32>
    %c0_14 = arith.constant 0 : index
    %c0_15 = arith.constant 0 : index
    %19 = vector.load %arg3[%c0_14, %c0_15] : memref<1x32xf32, #tpu.memory_space<vmem>>, vector<1x32xf32>
    %20 = vector.broadcast %19 : vector<1x32xf32> to vector<10x32xf32>
    %21 = arith.addf %18, %20 : vector<10x32xf32>
    %cst_16 = arith.constant 0.000000e+00 : f32
    %22 = vector.broadcast %cst_16 : f32 to vector<10x32xf32>
    %23 = arith.maximumf %21, %22 : vector<10x32xf32>
    %24 = vector.broadcast %0 : vector<10x1xf32> to vector<10x32xf32>
    %25 = arith.mulf %24, %23 : vector<10x32xf32>
    %cst_17 = arith.constant 0.000000e+00 : f32
    %26 = vector.broadcast %cst_17 : f32 to vector<1x32xf32>
    %27 = vector.extract_strided_slice %25 {offsets = [0, 0], sizes = [9, 32], strides = [1, 1]} : vector<10x32xf32> to vector<9x32xf32>
    %28 = tpu.concatenate %26, %27 in 0 : vector<1x32xf32>, vector<9x32xf32> -> vector<10x32xf32>
    %29 = vector.extract_strided_slice %25 {offsets = [1, 0], sizes = [9, 32], strides = [1, 1]} : vector<10x32xf32> to vector<9x32xf32>
    %30 = tpu.concatenate %29, %26 in 0 : vector<9x32xf32>, vector<1x32xf32> -> vector<10x32xf32>
    %c0_18 = arith.constant 0 : index
    %c0_19 = arith.constant 0 : index
    %c0_20 = arith.constant 0 : index
    %31 = vector.load %arg4[%c0_18, %c0_19, %c0_20] : memref<3x32x32xf32, #tpu.memory_space<vmem>>, vector<1x32x32xf32>
    %32 = vector.shape_cast %31 : vector<1x32x32xf32> to vector<32x32xf32>
    %cst_21 = arith.constant dense<0.000000e+00> : vector<10x32xf32>
    %33 = tpu.matmul %28, %32, %cst_21 {dimension_numbers = #tpu.dot_dimension_numbers<[1], [0], [0], [1], [0, 0, 1, 1], [], []>} : vector<10x32xf32>, vector<32x32xf32>, vector<10x32xf32> -> vector<10x32xf32>
    %c1_22 = arith.constant 1 : index
    %c0_23 = arith.constant 0 : index
    %c0_24 = arith.constant 0 : index
    %34 = vector.load %arg4[%c1_22, %c0_23, %c0_24] : memref<3x32x32xf32, #tpu.memory_space<vmem>>, vector<1x32x32xf32>
    %35 = vector.shape_cast %34 : vector<1x32x32xf32> to vector<32x32xf32>
    %cst_25 = arith.constant dense<0.000000e+00> : vector<10x32xf32>
    %36 = tpu.matmul %25, %35, %cst_25 {dimension_numbers = #tpu.dot_dimension_numbers<[1], [0], [0], [1], [0, 0, 1, 1], [], []>} : vector<10x32xf32>, vector<32x32xf32>, vector<10x32xf32> -> vector<10x32xf32>
    %37 = arith.addf %33, %36 : vector<10x32xf32>
    %c2_26 = arith.constant 2 : index
    %c0_27 = arith.constant 0 : index
    %c0_28 = arith.constant 0 : index
    %38 = vector.load %arg4[%c2_26, %c0_27, %c0_28] : memref<3x32x32xf32, #tpu.memory_space<vmem>>, vector<1x32x32xf32>
    %39 = vector.shape_cast %38 : vector<1x32x32xf32> to vector<32x32xf32>
    %cst_29 = arith.constant dense<0.000000e+00> : vector<10x32xf32>
    %40 = tpu.matmul %30, %39, %cst_29 {dimension_numbers = #tpu.dot_dimension_numbers<[1], [0], [0], [1], [0, 0, 1, 1], [], []>} : vector<10x32xf32>, vector<32x32xf32>, vector<10x32xf32> -> vector<10x32xf32>
    %41 = arith.addf %37, %40 : vector<10x32xf32>
    %c0_30 = arith.constant 0 : index
    %c0_31 = arith.constant 0 : index
    %42 = vector.load %arg5[%c0_30, %c0_31] : memref<1x32xf32, #tpu.memory_space<vmem>>, vector<1x32xf32>
    %43 = vector.broadcast %42 : vector<1x32xf32> to vector<10x32xf32>
    %44 = arith.addf %41, %43 : vector<10x32xf32>
    %cst_32 = arith.constant 0.000000e+00 : f32
    %45 = vector.broadcast %cst_32 : f32 to vector<10x32xf32>
    %46 = arith.maximumf %44, %45 : vector<10x32xf32>
    %47 = vector.broadcast %0 : vector<10x1xf32> to vector<10x32xf32>
    %48 = arith.mulf %47, %46 : vector<10x32xf32>
    %c0_33 = arith.constant 0 : index
    %c0_34 = arith.constant 0 : index
    %49 = vector.load %arg9[%c0_33, %c0_34] : memref<8x10xf32, #tpu.memory_space<vmem>>, vector<8x10xf32>
    %cst_35 = arith.constant dense<0.000000e+00> : vector<8x32xf32>
    %50 = tpu.matmul %49, %48, %cst_35 {dimension_numbers = #tpu.dot_dimension_numbers<[1], [0], [0], [1], [0, 0, 1, 1], [], []>} : vector<8x10xf32>, vector<10x32xf32>, vector<8x32xf32> -> vector<8x32xf32>
    %cst_36 = arith.constant 0.000000e+00 : f32
    %51 = vector.broadcast %cst_36 : f32 to vector<1x12xf32>
    %52 = vector.extract_strided_slice %50 {offsets = [0, 0], sizes = [1, 32], strides = [1, 1]} : vector<8x32xf32> to vector<1x32xf32>
    %c0_37 = arith.constant 0 : index
    %c0_38 = arith.constant 0 : index
    %c0_39 = arith.constant 0 : index
    %53 = vector.load %arg6[%c0_37, %c0_38, %c0_39] : memref<8x32x12xf32, #tpu.memory_space<vmem>>, vector<1x32x12xf32>
    %54 = vector.shape_cast %53 : vector<1x32x12xf32> to vector<32x12xf32>
    %cst_40 = arith.constant dense<0.000000e+00> : vector<1x12xf32>
    %55 = tpu.matmul %52, %54, %cst_40 {dimension_numbers = #tpu.dot_dimension_numbers<[1], [0], [0], [1], [0, 0, 1, 1], [], []>} : vector<1x32xf32>, vector<32x12xf32>, vector<1x12xf32> -> vector<1x12xf32>
    %56 = arith.addf %51, %55 : vector<1x12xf32>
    %57 = vector.extract_strided_slice %50 {offsets = [1, 0], sizes = [1, 32], strides = [1, 1]} : vector<8x32xf32> to vector<1x32xf32>
    %c1_41 = arith.constant 1 : index
    %c0_42 = arith.constant 0 : index
    %c0_43 = arith.constant 0 : index
    %58 = vector.load %arg6[%c1_41, %c0_42, %c0_43] : memref<8x32x12xf32, #tpu.memory_space<vmem>>, vector<1x32x12xf32>
    %59 = vector.shape_cast %58 : vector<1x32x12xf32> to vector<32x12xf32>
    %cst_44 = arith.constant dense<0.000000e+00> : vector<1x12xf32>
    %60 = tpu.matmul %57, %59, %cst_44 {dimension_numbers = #tpu.dot_dimension_numbers<[1], [0], [0], [1], [0, 0, 1, 1], [], []>} : vector<1x32xf32>, vector<32x12xf32>, vector<1x12xf32> -> vector<1x12xf32>
    %61 = arith.addf %56, %60 : vector<1x12xf32>
    %62 = vector.extract_strided_slice %50 {offsets = [2, 0], sizes = [1, 32], strides = [1, 1]} : vector<8x32xf32> to vector<1x32xf32>
    %c2_45 = arith.constant 2 : index
    %c0_46 = arith.constant 0 : index
    %c0_47 = arith.constant 0 : index
    %63 = vector.load %arg6[%c2_45, %c0_46, %c0_47] : memref<8x32x12xf32, #tpu.memory_space<vmem>>, vector<1x32x12xf32>
    %64 = vector.shape_cast %63 : vector<1x32x12xf32> to vector<32x12xf32>
    %cst_48 = arith.constant dense<0.000000e+00> : vector<1x12xf32>
    %65 = tpu.matmul %62, %64, %cst_48 {dimension_numbers = #tpu.dot_dimension_numbers<[1], [0], [0], [1], [0, 0, 1, 1], [], []>} : vector<1x32xf32>, vector<32x12xf32>, vector<1x12xf32> -> vector<1x12xf32>
    %66 = arith.addf %61, %65 : vector<1x12xf32>
    %67 = vector.extract_strided_slice %50 {offsets = [3, 0], sizes = [1, 32], strides = [1, 1]} : vector<8x32xf32> to vector<1x32xf32>
    %c3 = arith.constant 3 : index
    %c0_49 = arith.constant 0 : index
    %c0_50 = arith.constant 0 : index
    %68 = vector.load %arg6[%c3, %c0_49, %c0_50] : memref<8x32x12xf32, #tpu.memory_space<vmem>>, vector<1x32x12xf32>
    %69 = vector.shape_cast %68 : vector<1x32x12xf32> to vector<32x12xf32>
    %cst_51 = arith.constant dense<0.000000e+00> : vector<1x12xf32>
    %70 = tpu.matmul %67, %69, %cst_51 {dimension_numbers = #tpu.dot_dimension_numbers<[1], [0], [0], [1], [0, 0, 1, 1], [], []>} : vector<1x32xf32>, vector<32x12xf32>, vector<1x12xf32> -> vector<1x12xf32>
    %71 = arith.addf %66, %70 : vector<1x12xf32>
    %72 = vector.extract_strided_slice %50 {offsets = [4, 0], sizes = [1, 32], strides = [1, 1]} : vector<8x32xf32> to vector<1x32xf32>
    %c4 = arith.constant 4 : index
    %c0_52 = arith.constant 0 : index
    %c0_53 = arith.constant 0 : index
    %73 = vector.load %arg6[%c4, %c0_52, %c0_53] : memref<8x32x12xf32, #tpu.memory_space<vmem>>, vector<1x32x12xf32>
    %74 = vector.shape_cast %73 : vector<1x32x12xf32> to vector<32x12xf32>
    %cst_54 = arith.constant dense<0.000000e+00> : vector<1x12xf32>
    %75 = tpu.matmul %72, %74, %cst_54 {dimension_numbers = #tpu.dot_dimension_numbers<[1], [0], [0], [1], [0, 0, 1, 1], [], []>} : vector<1x32xf32>, vector<32x12xf32>, vector<1x12xf32> -> vector<1x12xf32>
    %76 = arith.addf %71, %75 : vector<1x12xf32>
    %77 = vector.extract_strided_slice %50 {offsets = [5, 0], sizes = [1, 32], strides = [1, 1]} : vector<8x32xf32> to vector<1x32xf32>
    %c5 = arith.constant 5 : index
    %c0_55 = arith.constant 0 : index
    %c0_56 = arith.constant 0 : index
    %78 = vector.load %arg6[%c5, %c0_55, %c0_56] : memref<8x32x12xf32, #tpu.memory_space<vmem>>, vector<1x32x12xf32>
    %79 = vector.shape_cast %78 : vector<1x32x12xf32> to vector<32x12xf32>
    %cst_57 = arith.constant dense<0.000000e+00> : vector<1x12xf32>
    %80 = tpu.matmul %77, %79, %cst_57 {dimension_numbers = #tpu.dot_dimension_numbers<[1], [0], [0], [1], [0, 0, 1, 1], [], []>} : vector<1x32xf32>, vector<32x12xf32>, vector<1x12xf32> -> vector<1x12xf32>
    %81 = arith.addf %76, %80 : vector<1x12xf32>
    %82 = vector.extract_strided_slice %50 {offsets = [6, 0], sizes = [1, 32], strides = [1, 1]} : vector<8x32xf32> to vector<1x32xf32>
    %c6 = arith.constant 6 : index
    %c0_58 = arith.constant 0 : index
    %c0_59 = arith.constant 0 : index
    %83 = vector.load %arg6[%c6, %c0_58, %c0_59] : memref<8x32x12xf32, #tpu.memory_space<vmem>>, vector<1x32x12xf32>
    %84 = vector.shape_cast %83 : vector<1x32x12xf32> to vector<32x12xf32>
    %cst_60 = arith.constant dense<0.000000e+00> : vector<1x12xf32>
    %85 = tpu.matmul %82, %84, %cst_60 {dimension_numbers = #tpu.dot_dimension_numbers<[1], [0], [0], [1], [0, 0, 1, 1], [], []>} : vector<1x32xf32>, vector<32x12xf32>, vector<1x12xf32> -> vector<1x12xf32>
    %86 = arith.addf %81, %85 : vector<1x12xf32>
    %87 = vector.extract_strided_slice %50 {offsets = [7, 0], sizes = [1, 32], strides = [1, 1]} : vector<8x32xf32> to vector<1x32xf32>
    %c7 = arith.constant 7 : index
    %c0_61 = arith.constant 0 : index
    %c0_62 = arith.constant 0 : index
    %88 = vector.load %arg6[%c7, %c0_61, %c0_62] : memref<8x32x12xf32, #tpu.memory_space<vmem>>, vector<1x32x12xf32>
    %89 = vector.shape_cast %88 : vector<1x32x12xf32> to vector<32x12xf32>
    %cst_63 = arith.constant dense<0.000000e+00> : vector<1x12xf32>
    %90 = tpu.matmul %87, %89, %cst_63 {dimension_numbers = #tpu.dot_dimension_numbers<[1], [0], [0], [1], [0, 0, 1, 1], [], []>} : vector<1x32xf32>, vector<32x12xf32>, vector<1x12xf32> -> vector<1x12xf32>
    %91 = arith.addf %86, %90 : vector<1x12xf32>
    %c0_64 = arith.constant 0 : index
    %c0_65 = arith.constant 0 : index
    %92 = vector.load %arg7[%c0_64, %c0_65] : memref<1x12xf32, #tpu.memory_space<vmem>>, vector<1x12xf32>
    %93 = arith.addf %91, %92 : vector<1x12xf32>
    %c0_66 = arith.constant 0 : index
    %c0_67 = arith.constant 0 : index
    %c0_68 = arith.constant 0 : index
    %94 = vector.load %arg10[%c0_66, %c0_67, %c0_68] : memref<1x1x12xf32, #tpu.memory_space<vmem>>, vector<1x1x12xf32>
    %95 = vector.shape_cast %94 : vector<1x1x12xf32> to vector<1x12xf32>
    %96 = vector.shape_cast %93 : vector<1x12xf32> to vector<1x1x12xf32>
    tpu.vector_store %arg10[%c0_66, %c0_67, %c0_68], %96 {strides = array<i32>} : memref<1x1x12xf32, #tpu.memory_space<vmem>>, vector<1x1x12xf32>,
    return
  }
  func.func @transform_0(%arg0: i32) -> (i32, i32, i32) {
    %c0_i32 = arith.constant 0 : i32
    %c0_i32_0 = arith.constant 0 : i32
    %c0_i32_1 = arith.constant 0 : i32
    return %arg0, %c0_i32, %c0_i32_0 : i32, i32, i32
  }
  func.func @transform_1(%arg0: i32) -> (i32, i32, i32) {
    %c0_i32 = arith.constant 0 : i32
    %c0_i32_0 = arith.constant 0 : i32
    %c0_i32_1 = arith.constant 0 : i32
    %c0_i32_2 = arith.constant 0 : i32
    return %c0_i32, %c0_i32_0, %c0_i32_1 : i32, i32, i32
  }
  func.func @transform_2(%arg0: i32) -> (i32, i32) {
    %c0_i32 = arith.constant 0 : i32
    %c0_i32_0 = arith.constant 0 : i32
    %c0_i32_1 = arith.constant 0 : i32
    return %c0_i32, %c0_i32_0 : i32, i32
  }
  func.func @transform_3(%arg0: i32) -> (i32, i32, i32) {
    %c0_i32 = arith.constant 0 : i32
    %c0_i32_0 = arith.constant 0 : i32
    %c0_i32_1 = arith.constant 0 : i32
    %c0_i32_2 = arith.constant 0 : i32
    return %c0_i32, %c0_i32_0, %c0_i32_1 : i32, i32, i32
  }
  func.func @transform_4(%arg0: i32) -> (i32, i32) {
    %c0_i32 = arith.constant 0 : i32
    %c0_i32_0 = arith.constant 0 : i32
    %c0_i32_1 = arith.constant 0 : i32
    return %c0_i32, %c0_i32_0 : i32, i32
  }
  func.func @transform_5(%arg0: i32) -> (i32, i32, i32) {
    %c0_i32 = arith.constant 0 : i32
    %c0_i32_0 = arith.constant 0 : i32
    %c0_i32_1 = arith.constant 0 : i32
    %c0_i32_2 = arith.constant 0 : i32
    return %c0_i32, %c0_i32_0, %c0_i32_1 : i32, i32, i32
  }
  func.func @transform_6(%arg0: i32) -> (i32, i32) {
    %c0_i32 = arith.constant 0 : i32
    %c0_i32_0 = arith.constant 0 : i32
    %c0_i32_1 = arith.constant 0 : i32
    return %c0_i32, %c0_i32_0 : i32, i32
  }
  func.func @transform_7(%arg0: i32) -> (i32, i32) {
    %c0_i32 = arith.constant 0 : i32
    %c0_i32_0 = arith.constant 0 : i32
    %c0_i32_1 = arith.constant 0 : i32
    return %c0_i32, %c0_i32_0 : i32, i32
  }
  func.func @transform_8(%arg0: i32) -> (i32, i32) {
    %c0_i32 = arith.constant 0 : i32
    %c0_i32_0 = arith.constant 0 : i32
    %c0_i32_1 = arith.constant 0 : i32
    return %c0_i32, %c0_i32_0 : i32, i32
  }
  func.func @transform_9(%arg0: i32) -> (i32, i32, i32) {
    %c0_i32 = arith.constant 0 : i32
    %c0_i32_0 = arith.constant 0 : i32
    %c0_i32_1 = arith.constant 0 : i32
    return %arg0, %c0_i32, %c0_i32_0 : i32, i32, i32
  }
}

</mosaic_0001>

<llo_original>
// kernel: tpu_custom_call.1
$region0: #{tpu_custom_call.1}
  #allocation0 [shape = 'u32[]', space=smem, size = 0x4, offset = 0x4, fixed_abs, tag = 'smem constant byte address 0x4 - core index']
  #allocation1 [shape = 'u32[144,128]{1,0:T(1,128)}', space=vmem, size = 0x12000, scoped, tag = 'internal scratch']
  %s0 = inlined_call_operand.vmem [shape: f32[2,10,4], index: 0, kind: input, shape index: {}]
  %s1 = inlined_call_operand.vmem [shape: f32[3,4,32], index: 1, kind: input, shape index: {}]
  %s2 = inlined_call_operand.vmem [shape: f32[1,32], index: 2, kind: input, shape index: {}]
  %s3 = inlined_call_operand.vmem [shape: f32[3,32,32], index: 3, kind: input, shape index: {}]
  %s4 = inlined_call_operand.vmem [shape: f32[1,32], index: 4, kind: input, shape index: {}]
  %s5 = inlined_call_operand.vmem [shape: f32[8,32,12], index: 5, kind: input, shape index: {}]
  %s6 = inlined_call_operand.vmem [shape: f32[1,12], index: 6, kind: input, shape index: {}]
  %s7 = inlined_call_operand.vmem [shape: f32[10,1], index: 7, kind: input, shape index: {}]
  %s8 = inlined_call_operand.vmem [shape: f32[8,10], index: 8, kind: input, shape index: {}]
  %s9 = inlined_call_operand.hbm [shape: f32[2,1,12], index: 9, kind: output, shape index: {}]
  %s10 = sld [smem:[#allocation0]]
  $region69: #{tpu_custom_call.1} parent=0
    _
  %s12 = ssub.s32 1, %s10
  %s13 = scalar_select 0, %s12, %s10
  $region1: #{tpu_custom_call.1} parent=0
    #allocation2 [shape = 'u8[1024]{0}', space=vmem, size = 0x400, scoped, tag = 'output window, operand 0']
    #allocation3 [shape = 's32[2]{0}', space=sflag, size = 0x8, scoped, tag = 'scoped memory for tpu_custom_call.1']
    %14 = vsyncpa [#allocation3], 0
    %s15 = scalar_lea.sflag [#allocation3], 1
    %16 = vsyncpa %s15, 0
    loop: start=0, step=1, limit=4
    $region2: #{tpu_custom_call.1} parent=1 // loop_pre_header
      _
    $region3: #{tpu_custom_call.1} parent=1 // loop_header
      %s18 = sphi 0, %s22
      %p19 = scmp.ge.s32.totalorder %s18, 4
      %s28 = sphi 0, %s30
      %s31 = sphi 0, %s28
      %s32 = sphi 0, %s31
      %s48 = sphi 0, %s32
      %s52 = sphi 0, %s52
      %s54 = sphi 0, %s52
      %s55 = sphi 0, %s54
      %s69 = sphi 0, %s55
      %s73 = sphi 0, %s73
      %s75 = sphi 0, %s73
      %s76 = sphi 0, %s75
      %s90 = sphi 0, %s76
      %s94 = sphi 0, %s94
      %s96 = sphi 0, %s94
      %s97 = sphi 0, %s96
      %s111 = sphi 0, %s97
      %s115 = sphi 0, %s115
      %s117 = sphi 0, %s115
      %s118 = sphi 0, %s117
      %s132 = sphi 0, %s118
      %s136 = sphi 0, %s136
      %s138 = sphi 0, %s136
      %s139 = sphi 0, %s138
      %s153 = sphi 0, %s139
      %s157 = sphi 0, %s157
      %s159 = sphi 0, %s157
      %s160 = sphi 0, %s159
      %s174 = sphi 0, %s160
      %s178 = sphi 0, %s178
      %s180 = sphi 0, %s178
      %s181 = sphi 0, %s180
      %s195 = sphi 0, %s181
      %s199 = sphi 0, %s199
      %s201 = sphi 0, %s199
      %s202 = sphi 0, %s201
      %s216 = sphi 0, %s202
      %s222 = sphi 0, %s224
      %s225 = sphi 0, %s222
      %s226 = sphi 0, %s225
      %s242 = sphi 0, %s226
    $region4: #{tpu_custom_call.1} parent=1 // loop_header_branch
      %21 = sbr.rel (%p19) target = $region8
    $region5: #{tpu_custom_call.1} parent=1 // loop_body
      %s23 = ssub.s32 %s18, 1
      %s24 = ssub.s32 %s18, 2
      %s25 = sadd.s32 %s18, 1
      %s26 = ssub.s32 %s18, %s25
      %p27 = scmp.eq.s32.totalorder %s26, 0
      %s29 = sadd.s32 %s28, 1
      %s30 = scalar_select %p27, %s28, %s29
      %p33 = pneg %p27
      %p34 = scmp.eq.s32.totalorder %s18, 1
      %p35 = por %p33, %p34
      %p36 = scmp.ne.s32.totalorder %s28, %s31
      %p37 = scmp.eq.s32.totalorder %s18, 0
      %p38 = por %p36, %p37
      %p39 = scmp.ne.s32.totalorder %s28, %s31
      %p40 = scmp.eq.s32.totalorder %s23, 1
      %p41 = por %p39, %p40
      %p42 = scmp.ne.s32.totalorder %s31, %s32
      %p43 = scmp.eq.s32.totalorder %s23, 0
      %p44 = por %p42, %p43
      %p45 = scmp.ne.s32.totalorder %s31, %s32
      %p46 = scmp.eq.s32.totalorder %s24, 1
      %p47 = por %p45, %p46
      %p49 = scmp.ne.s32.totalorder %s32, %s48
      %p50 = scmp.eq.s32.totalorder %s24, 0
      %p51 = por %p49, %p50
      %s53 = sadd.s32 %s52, 1
      %p56 = scmp.eq.s32.totalorder %s18, 1
      %p57 = scmp.ne.s32.totalorder %s52, %s54
      %p58 = scmp.eq.s32.totalorder %s18, 0
      %p59 = por %p57, %p58
      %p60 = scmp.ne.s32.totalorder %s52, %s54
      %p61 = scmp.eq.s32.totalorder %s23, 1
      %p62 = por %p60, %p61
      %p63 = scmp.ne.s32.totalorder %s54, %s55
      %p64 = scmp.eq.s32.totalorder %s23, 0
      %p65 = por %p63, %p64
      %p66 = scmp.ne.s32.totalorder %s54, %s55
      %p67 = scmp.eq.s32.totalorder %s24, 1
      %p68 = por %p66, %p67
      %p70 = scmp.ne.s32.totalorder %s55, %s69
      %p71 = scmp.eq.s32.totalorder %s24, 0
      %p72 = por %p70, %p71
      %s74 = sadd.s32 %s73, 1
      %p77 = scmp.eq.s32.totalorder %s18, 1
      %p78 = scmp.ne.s32.totalorder %s73, %s75
      %p79 = scmp.eq.s32.totalorder %s18, 0
      %p80 = por %p78, %p79
      %p81 = scmp.ne.s32.totalorder %s73, %s75
      %p82 = scmp.eq.s32.totalorder %s23, 1
      %p83 = por %p81, %p82
      %p84 = scmp.ne.s32.totalorder %s75, %s76
      %p85 = scmp.eq.s32.totalorder %s23, 0
      %p86 = por %p84, %p85
      %p87 = scmp.ne.s32.totalorder %s75, %s76
      %p88 = scmp.eq.s32.totalorder %s24, 1
      %p89 = por %p87, %p88
      %p91 = scmp.ne.s32.totalorder %s76, %s90
      %p92 = scmp.eq.s32.totalorder %s24, 0
      %p93 = por %p91, %p92
      %s95 = sadd.s32 %s94, 1
      %p98 = scmp.eq.s32.totalorder %s18, 1
      %p99 = scmp.ne.s32.totalorder %s94, %s96
      %p100 = scmp.eq.s32.totalorder %s18, 0
      %p101 = por %p99, %p100
      %p102 = scmp.ne.s32.totalorder %s94, %s96
      %p103 = scmp.eq.s32.totalorder %s23, 1
      %p104 = por %p102, %p103
      %p105 = scmp.ne.s32.totalorder %s96, %s97
      %p106 = scmp.eq.s32.totalorder %s23, 0
      %p107 = por %p105, %p106
      %p108 = scmp.ne.s32.totalorder %s96, %s97
      %p109 = scmp.eq.s32.totalorder %s24, 1
      %p110 = por %p108, %p109
      %p112 = scmp.ne.s32.totalorder %s97, %s111
      %p113 = scmp.eq.s32.totalorder %s24, 0
      %p114 = por %p112, %p113
      %s116 = sadd.s32 %s115, 1
      %p119 = scmp.eq.s32.totalorder %s18, 1
      %p120 = scmp.ne.s32.totalorder %s115, %s117
      %p121 = scmp.eq.s32.totalorder %s18, 0
      %p122 = por %p120, %p121
      %p123 = scmp.ne.s32.totalorder %s115, %s117
      %p124 = scmp.eq.s32.totalorder %s23, 1
      %p125 = por %p123, %p124
      %p126 = scmp.ne.s32.totalorder %s117, %s118
      %p127 = scmp.eq.s32.totalorder %s23, 0
      %p128 = por %p126, %p127
      %p129 = scmp.ne.s32.totalorder %s117, %s118
      %p130 = scmp.eq.s32.totalorder %s24, 1
      %p131 = por %p129, %p130
      %p133 = scmp.ne.s32.totalorder %s118, %s132
      %p134 = scmp.eq.s32.totalorder %s24, 0
      %p135 = por %p133, %p134
      %s137 = sadd.s32 %s136, 1
      %p140 = scmp.eq.s32.totalorder %s18, 1
      %p141 = scmp.ne.s32.totalorder %s136, %s138
      %p142 = scmp.eq.s32.totalorder %s18, 0
      %p143 = por %p141, %p142
      %p144 = scmp.ne.s32.totalorder %s136, %s138
      %p145 = scmp.eq.s32.totalorder %s23, 1
      %p146 = por %p144, %p145
      %p147 = scmp.ne.s32.totalorder %s138, %s139
      %p148 = scmp.eq.s32.totalorder %s23, 0
      %p149 = por %p147, %p148
      %p150 = scmp.ne.s32.totalorder %s138, %s139
      %p151 = scmp.eq.s32.totalorder %s24, 1
      %p152 = por %p150, %p151
      %p154 = scmp.ne.s32.totalorder %s139, %s153
      %p155 = scmp.eq.s32.totalorder %s24, 0
      %p156 = por %p154, %p155
      %s158 = sadd.s32 %s157, 1
      %p161 = scmp.eq.s32.totalorder %s18, 1
      %p162 = scmp.ne.s32.totalorder %s157, %s159
      %p163 = scmp.eq.s32.totalorder %s18, 0
      %p164 = por %p162, %p163
      %p165 = scmp.ne.s32.totalorder %s157, %s159
      %p166 = scmp.eq.s32.totalorder %s23, 1
      %p167 = por %p165, %p166
      %p168 = scmp.ne.s32.totalorder %s159, %s160
      %p169 = scmp.eq.s32.totalorder %s23, 0
      %p170 = por %p168, %p169
      %p171 = scmp.ne.s32.totalorder %s159, %s160
      %p172 = scmp.eq.s32.totalorder %s24, 1
      %p173 = por %p171, %p172
      %p175 = scmp.ne.s32.totalorder %s160, %s174
      %p176 = scmp.eq.s32.totalorder %s24, 0
      %p177 = por %p175, %p176
      %s179 = sadd.s32 %s178, 1
      %p182 = scmp.eq.s32.totalorder %s18, 1
      %p183 = scmp.ne.s32.totalorder %s178, %s180
      %p184 = scmp.eq.s32.totalorder %s18, 0
      %p185 = por %p183, %p184
      %p186 = scmp.ne.s32.totalorder %s178, %s180
      %p187 = scmp.eq.s32.totalorder %s23, 1
      %p188 = por %p186, %p187
      %p189 = scmp.ne.s32.totalorder %s180, %s181
      %p190 = scmp.eq.s32.totalorder %s23, 0
      %p191 = por %p189, %p190
      %p192 = scmp.ne.s32.totalorder %s180, %s181
      %p193 = scmp.eq.s32.totalorder %s24, 1
      %p194 = por %p192, %p193
      %p196 = scmp.ne.s32.totalorder %s181, %s195
      %p197 = scmp.eq.s32.totalorder %s24, 0
      %p198 = por %p196, %p197
      %s200 = sadd.s32 %s199, 1
      %p203 = scmp.eq.s32.totalorder %s18, 1
      %p204 = scmp.ne.s32.totalorder %s199, %s201
      %p205 = scmp.eq.s32.totalorder %s18, 0
      %p206 = por %p204, %p205
      %p207 = scmp.ne.s32.totalorder %s199, %s201
      %p208 = scmp.eq.s32.totalorder %s23, 1
      %p209 = por %p207, %p208
      %p210 = scmp.ne.s32.totalorder %s201, %s202
      %p211 = scmp.eq.s32.totalorder %s23, 0
      %p212 = por %p210, %p211
      %p213 = scmp.ne.s32.totalorder %s201, %s202
      %p214 = scmp.eq.s32.totalorder %s24, 1
      %p215 = por %p213, %p214
      %p217 = scmp.ne.s32.totalorder %s202, %s216
      %p218 = scmp.eq.s32.totalorder %s24, 0
      %p219 = por %p217, %p218
      %s220 = ssub.s32 %s18, %s25
      %p221 = scmp.eq.s32.totalorder %s220, 0
      %s223 = sadd.s32 %s222, 1
      %s224 = scalar_select %p221, %s222, %s223
      %p227 = pneg %p221
      %p228 = scmp.eq.s32.totalorder %s18, 1
      %p229 = por %p227, %p228
      %p230 = scmp.ne.s32.totalorder %s222, %s225
      %p231 = scmp.eq.s32.totalorder %s18, 0
      %p232 = por %p230, %p231
      %p233 = scmp.ne.s32.totalorder %s222, %s225
      %p234 = scmp.eq.s32.totalorder %s23, 1
      %p235 = por %p233, %p234
      %p236 = scmp.ne.s32.totalorder %s225, %s226
      %p237 = scmp.eq.s32.totalorder %s23, 0
      %p238 = por %p236, %p237
      %p239 = scmp.ne.s32.totalorder %s225, %s226
      %p240 = scmp.eq.s32.totalorder %s24, 1
      %p241 = por %p239, %p240
      %p243 = scmp.ne.s32.totalorder %s226, %s242
      %p244 = scmp.eq.s32.totalorder %s24, 0
      %p245 = por %p243, %p244
      %p246 = scmp.le.s32.totalorder 1, %s18
      %p247 = scmp.lt.s32.totalorder %s18, 3
      %p248 = pnand %p246, %p247
      %p249 = pneg %p248
      // Predicated region
      $region9: #{tpu_custom_call.1} parent=5 // pred_check
        _
      $region10: #{tpu_custom_call.1} parent=5 // pred_check_branch
        %251 = sbr.rel (%p248) target = $region12
      $region11: #{tpu_custom_call.1} parent=5 // pred_region
        %s252 = ssub.s32 %s18, 1
        // Predicated region
        $region13: #{tpu_custom_call.1} parent=11 // pred_check
          %p253 = pneg %p65
        $region14: #{tpu_custom_call.1} parent=11 // pred_check_branch
          %255 = sbr.rel (%p253) target = $region16
        $region15: #{tpu_custom_call.1} parent=11 // pred_region
          _
        $region16: #{tpu_custom_call.1} parent=11 // pred_fallthru
          _
        // Predicated region
        $region17: #{tpu_custom_call.1} parent=11 // pred_check
          %p256 = pneg %p86
        $region18: #{tpu_custom_call.1} parent=11 // pred_check_branch
          %258 = sbr.rel (%p256) target = $region20
        $region19: #{tpu_custom_call.1} parent=11 // pred_region
          _
        $region20: #{tpu_custom_call.1} parent=11 // pred_fallthru
          _
        // Predicated region
        $region21: #{tpu_custom_call.1} parent=11 // pred_check
          %p259 = pneg %p107
        $region22: #{tpu_custom_call.1} parent=11 // pred_check_branch
          %261 = sbr.rel (%p259) target = $region24
        $region23: #{tpu_custom_call.1} parent=11 // pred_region
          _
        $region24: #{tpu_custom_call.1} parent=11 // pred_fallthru
          _
        // Predicated region
        $region25: #{tpu_custom_call.1} parent=11 // pred_check
          %p262 = pneg %p128
        $region26: #{tpu_custom_call.1} parent=11 // pred_check_branch
          %264 = sbr.rel (%p262) target = $region28
        $region27: #{tpu_custom_call.1} parent=11 // pred_region
          _
        $region28: #{tpu_custom_call.1} parent=11 // pred_fallthru
          _
        // Predicated region
        $region29: #{tpu_custom_call.1} parent=11 // pred_check
          %p265 = pneg %p149
        $region30: #{tpu_custom_call.1} parent=11 // pred_check_branch
          %267 = sbr.rel (%p265) target = $region32
        $region31: #{tpu_custom_call.1} parent=11 // pred_region
          _
        $region32: #{tpu_custom_call.1} parent=11 // pred_fallthru
          _
        // Predicated region
        $region33: #{tpu_custom_call.1} parent=11 // pred_check
          %p268 = pneg %p170
        $region34: #{tpu_custom_call.1} parent=11 // pred_check_branch
          %270 = sbr.rel (%p268) target = $region36
        $region35: #{tpu_custom_call.1} parent=11 // pred_region
          _
        $region36: #{tpu_custom_call.1} parent=11 // pred_fallthru
          _
        // Predicated region
        $region37: #{tpu_custom_call.1} parent=11 // pred_check
          %p271 = pneg %p191
        $region38: #{tpu_custom_call.1} parent=11 // pred_check_branch
          %273 = sbr.rel (%p271) target = $region40
        $region39: #{tpu_custom_call.1} parent=11 // pred_region
          _
        $region40: #{tpu_custom_call.1} parent=11 // pred_fallthru
          _
        // Predicated region
        $region41: #{tpu_custom_call.1} parent=11 // pred_check
          %p274 = pneg %p212
        $region42: #{tpu_custom_call.1} parent=11 // pred_check_branch
          %276 = sbr.rel (%p274) target = $region44
        $region43: #{tpu_custom_call.1} parent=11 // pred_region
          _
        $region44: #{tpu_custom_call.1} parent=11 // pred_fallthru
          _
      $region12: #{tpu_custom_call.1} parent=5 // pred_fallthru
        _
      %p277 = scmp.lt.s32.totalorder %s18, 2
      // Predicated region
      $region45: #{tpu_custom_call.1} parent=5 // pred_check
        %p278 = pneg %p277
      $region46: #{tpu_custom_call.1} parent=5 // pred_check_branch
        %280 = sbr.rel (%p278) target = $region48
      $region47: #{tpu_custom_call.1} parent=5 // pred_region
        // Predicated region
        $region49: #{tpu_custom_call.1} parent=47 // pred_check
          %p281 = pneg %p38
        $region50: #{tpu_custom_call.1} parent=47 // pred_check_branch
          %283 = sbr.rel (%p281) target = $region52
        $region51: #{tpu_custom_call.1} parent=47 // pred_region
          %p284 = scmp.lt.s32.totalorder %s18, 1
          %s285 = scalar_select %p284, %s18, 1
          %s286 = smul.addr %s285, 2
          %s287 = smul.addr %s286, 8
          %s288 = scalar_lea.vmem %s0, %s287
        $region52: #{tpu_custom_call.1} parent=47 // pred_fallthru
          _
      $region48: #{tpu_custom_call.1} parent=5 // pred_fallthru
        _
      %p289 = scmp.le.s32.totalorder 1, %s18
      %p290 = scmp.lt.s32.totalorder %s18, 3
      %p291 = pnand %p289, %p290
      %p292 = pneg %p291
      // Predicated region
      $region53: #{tpu_custom_call.1} parent=5 // pred_check
        _
      $region54: #{tpu_custom_call.1} parent=5 // pred_check_branch
        %294 = sbr.rel (%p291) target = $region56
      $region55: #{tpu_custom_call.1} parent=5 // pred_region
        %s295 = ssub.s32 %s18, 1
        %p296 = scmp.lt.s32.totalorder %s23, 1
        %s297 = scalar_select %p296, %s23, 1
        %s298 = smul.addr %s297, 2
        %s299 = smul.addr %s298, 8
        %s300 = scalar_lea.vmem %s0, %s299
        %p301 = pneg %p44
        %p302 = pneg %p41
        %p303 = pneg %p65
        %p304 = pneg %p62
        %p305 = pneg %p86
        %p306 = pneg %p83
        %p307 = pneg %p107
        %p308 = pneg %p104
        %p309 = pneg %p128
        %p310 = pneg %p125
        %p311 = pneg %p149
        %p312 = pneg %p146
        %p313 = pneg %p170
        %p314 = pneg %p167
        %p315 = pneg %p191
        %p316 = pneg %p188
        %p317 = pneg %p212
        %p318 = pneg %p209
        %p319 = pneg %p238
        %p320 = pneg %p235
        %s321 = sand.u32 %s225, 1
        %s322 = scalar_lea.sflag [#allocation3], %s321
        %s323 = sand.u32 %s225, 1
        %s324 = scalar_lea.vmem [#allocation2], %s323
        %p325 = scmp.lt.s32.totalorder %s23, 1
        %s326 = scalar_select %p325, %s23, 1
        %s327 = smul.addr %s326, 2
        %s328 = smul.addr %s327, 8
        %s329 = scalar_lea.vmem %s0, %s328
        %v330 = vld [vmem:[%s7] sm:$0xff]
        %v331 = vld [vmem:[%s7 + $0x8] sm:$0x3]
        %v332 = vld [vmem:[%s329] sm:$0xff]
        %v333 = vld [vmem:[%s329 + $0x8] sm:$0x3]
        %vm336 = vcmask 1040384
        %v337 = vrot.slane %v332, 7
        %v338 = vrot.slane %v333, 7
        %v339 = vsel %vm336, %v337, %v338
        %v341 = vsel %vm336, 0.0, %v337
        %vm342 = vcmask 1046528
        %v343 = vrot.slane %v332, 1
        %v344 = vrot.slane %v333, 1
        %v345 = vsel %vm342, %v343, %v344
        %v347 = vsel %vm336, %v344, 0.0
        %v348 = vld [vmem:[%s1] sm:$0xf]
        %s349 = scalar_lea.vmem %s1, 4
        %v350 = vld [vmem:[%s349] sm:$0xf]
        %vm351 = vcmask 31744
        %v352 = vsel %vm351, %v332, 0
        %v354 = vsel %vm351, %v333, 0
        %vm356 = vcmask 1043456
        %v358 = vsel %vm356, %v350, 0
        %360 = vmatprep.subr.mxu0 0.0
        %361 = vmatpush1.msra.mxu0 %v358
        %362 = vmatprep.subr.mxu0 0.0
        %363 = vmatpush1.msra.mxu0 0.0
        %364 = vmatprep.subr.mxu0 0.0
        %365 = vmatpush1.msra.mxu0 0.0
        %366 = vmatprep.subr.mxu0 0.0
        %367 = vmatpush1.msra.mxu0 0.0
        %368 = vmatprep.subr.mxu0 0.0
        %369 = vmatpush1.msra.mxu0 0.0
        %370 = vmatprep.subr.mxu0 0.0
        %371 = vmatpush1.msra.mxu0 0.0
        %372 = vmatprep.subr.mxu0 0.0
        %373 = vmatpush1.msra.mxu0 0.0
        %374 = vmatprep.subr.mxu0 0.0
        %375 = vmatpush1.msra.mxu0 0.0
        %376 = vmatprep.subr.mxu0 0.0
        %377 = vmatpush1.msra.mxu0 0.0
        %378 = vmatprep.subr.mxu0 0.0
        %379 = vmatpush1.msra.mxu0 0.0
        %380 = vmatprep.subr.mxu0 0.0
        %381 = vmatpush1.msra.mxu0 0.0
        %382 = vmatprep.subr.mxu0 0.0
        %383 = vmatpush1.msra.mxu0 0.0
        %384 = vmatprep.subr.mxu0 0.0
        %385 = vmatpush1.msra.mxu0 0.0
        %386 = vmatprep.subr.mxu0 0.0
        %387 = vmatpush1.msra.mxu0 0.0
        %388 = vmatprep.subr.mxu0 0.0
        %389 = vmatpush1.msra.mxu0 0.0
        %390 = vmatprep.subr.mxu0 0.0
        %391 = vmatpush1.msra.mxu0 0.0
        %392 = vmatprep.subr.mxu0 0.0
        %393 = vmatpush1.msra.mxu0 0.0
        %394 = vmatprep.subr.mxu0 0.0
        %395 = vmatpush1.msra.mxu0 0.0
        %396 = vmatprep.subr.mxu0 0.0
        %397 = vmatpush1.msra.mxu0 0.0
        %398 = vmatprep.subr.mxu0 0.0
        %399 = vmatpush1.msra.mxu0 0.0
        %400 = vmatprep.subr.mxu0 0.0
        %401 = vmatpush1.msra.mxu0 0.0
        %402 = vmatprep.subr.mxu0 0.0
        %403 = vmatpush1.msra.mxu0 0.0
        %404 = vmatprep.subr.mxu0 0.0
        %405 = vmatpush1.msra.mxu0 0.0
        %406 = vmatprep.subr.mxu0 0.0
        %407 = vmatpush1.msra.mxu0 0.0
        %408 = vmatprep.subr.mxu0 0.0
        %409 = vmatpush1.msra.mxu0 0.0
        %410 = vmatprep.subr.mxu0 0.0
        %411 = vmatpush1.msra.mxu0 0.0
        %412 = vmatprep.subr.mxu0 0.0
        %413 = vmatpush1.msra.mxu0 0.0
        %414 = vmatprep.subr.mxu0 0.0
        %415 = vmatpush1.msra.mxu0 0.0
        %416 = vmatprep.subr.mxu0 0.0
        %417 = vmatpush1.msra.mxu0 0.0
        %418 = vmatprep.subr.mxu0 0.0
        %419 = vmatpush1.msra.mxu0 0.0
        %420 = vmatprep.subr.mxu0 0.0
        %421 = vmatpush1.msra.mxu0 0.0
        %422 = vmatprep.subr.mxu0 0.0
        %423 = vmatpush1.msra.mxu0 0.0
        %424 = vmatprep.mubr.f32.mxu0 0.0
        %425 = vmatmul.mubr.f32.gmra.mrb[0].mxu0 %v352
        %v426 = vpop.f32.mrb[0].mxu0
        %v427 = vadd.f32 0.0, %v426
        %v428 = vpop.f32.mrb[0].mxu0
        %429 = vmatprep.mubr.f32.mxu0 0.0
        %430 = vmatmul.mubr.f32.gmra.mrb[0].mxu0 %v354
        %v431 = vpop.f32.mrb[0].mxu0
        %v432 = vadd.f32 0.0, %v431
        %v433 = vpop.f32.mrb[0].mxu0
        %434 = vdwg.mxu0
        %v436 = vsel %vm351, %v341, 0
        %v438 = vsel %vm351, %v339, 0
        %v441 = vsel %vm356, %v348, 0
        %443 = vmatprep.subr.mxu0 0.0
        %444 = vmatpush1.msra.mxu0 %v441
        %445 = vmatprep.subr.mxu0 0.0
        %446 = vmatpush1.msra.mxu0 0.0
        %447 = vmatprep.subr.mxu0 0.0
        %448 = vmatpush1.msra.mxu0 0.0
        %449 = vmatprep.subr.mxu0 0.0
        %450 = vmatpush1.msra.mxu0 0.0
        %451 = vmatprep.subr.mxu0 0.0
        %452 = vmatpush1.msra.mxu0 0.0
        %453 = vmatprep.subr.mxu0 0.0
        %454 = vmatpush1.msra.mxu0 0.0
        %455 = vmatprep.subr.mxu0 0.0
        %456 = vmatpush1.msra.mxu0 0.0
        %457 = vmatprep.subr.mxu0 0.0
        %458 = vmatpush1.msra.mxu0 0.0
        %459 = vmatprep.subr.mxu0 0.0
        %460 = vmatpush1.msra.mxu0 0.0
        %461 = vmatprep.subr.mxu0 0.0
        %462 = vmatpush1.msra.mxu0 0.0
        %463 = vmatprep.subr.mxu0 0.0
        %464 = vmatpush1.msra.mxu0 0.0
        %465 = vmatprep.subr.mxu0 0.0
        %466 = vmatpush1.msra.mxu0 0.0
        %467 = vmatprep.subr.mxu0 0.0
        %468 = vmatpush1.msra.mxu0 0.0
        %469 = vmatprep.subr.mxu0 0.0
        %470 = vmatpush1.msra.mxu0 0.0
        %471 = vmatprep.subr.mxu0 0.0
        %472 = vmatpush1.msra.mxu0 0.0
        %473 = vmatprep.subr.mxu0 0.0
        %474 = vmatpush1.msra.mxu0 0.0
        %475 = vmatprep.subr.mxu0 0.0
        %476 = vmatpush1.msra.mxu0 0.0
        %477 = vmatprep.subr.mxu0 0.0
        %478 = vmatpush1.msra.mxu0 0.0
        %479 = vmatprep.subr.mxu0 0.0
        %480 = vmatpush1.msra.mxu0 0.0
        %481 = vmatprep.subr.mxu0 0.0
        %482 = vmatpush1.msra.mxu0 0.0
        %483 = vmatprep.subr.mxu0 0.0
        %484 = vmatpush1.msra.mxu0 0.0
        %485 = vmatprep.subr.mxu0 0.0
        %486 = vmatpush1.msra.mxu0 0.0
        %487 = vmatprep.subr.mxu0 0.0
        %488 = vmatpush1.msra.mxu0 0.0
        %489 = vmatprep.subr.mxu0 0.0
        %490 = vmatpush1.msra.mxu0 0.0
        %491 = vmatprep.subr.mxu0 0.0
        %492 = vmatpush1.msra.mxu0 0.0
        %493 = vmatprep.subr.mxu0 0.0
        %494 = vmatpush1.msra.mxu0 0.0
        %495 = vmatprep.subr.mxu0 0.0
        %496 = vmatpush1.msra.mxu0 0.0
        %497 = vmatprep.subr.mxu0 0.0
        %498 = vmatpush1.msra.mxu0 0.0
        %499 = vmatprep.subr.mxu0 0.0
        %500 = vmatpush1.msra.mxu0 0.0
        %501 = vmatprep.subr.mxu0 0.0
        %502 = vmatpush1.msra.mxu0 0.0
        %503 = vmatprep.subr.mxu0 0.0
        %504 = vmatpush1.msra.mxu0 0.0
        %505 = vmatprep.subr.mxu0 0.0
        %506 = vmatpush1.msra.mxu0 0.0
        %507 = vmatprep.mubr.f32.mxu0 0.0
        %508 = vmatmul.mubr.f32.gmra.mrb[0].mxu0 %v436
        %v509 = vpop.f32.mrb[0].mxu0
        %v510 = vadd.f32 %v427, %v509
        %v511 = vpop.f32.mrb[0].mxu0
        %512 = vmatprep.mubr.f32.mxu0 0.0
        %513 = vmatmul.mubr.f32.gmra.mrb[0].mxu0 %v438
        %v514 = vpop.f32.mrb[0].mxu0
        %v515 = vadd.f32 %v432, %v514
        %v516 = vpop.f32.mrb[0].mxu0
        %517 = vdwg.mxu0
        %s518 = scalar_lea.vmem %s1, 8
        %v519 = vld [vmem:[%s518] sm:$0xf]
        %v520 = vsel %vm351, %v345, 0
        %v523 = vsel %vm351, %v347, 0
        %v526 = vsel %vm356, %v519, 0
        %528 = vmatprep.subr.mxu0 0.0
        %529 = vmatpush1.msra.mxu0 %v526
        %530 = vmatprep.subr.mxu0 0.0
        %531 = vmatpush1.msra.mxu0 0.0
        %532 = vmatprep.subr.mxu0 0.0
        %533 = vmatpush1.msra.mxu0 0.0
        %534 = vmatprep.subr.mxu0 0.0
        %535 = vmatpush1.msra.mxu0 0.0
        %536 = vmatprep.subr.mxu0 0.0
        %537 = vmatpush1.msra.mxu0 0.0
        %538 = vmatprep.subr.mxu0 0.0
        %539 = vmatpush1.msra.mxu0 0.0
        %540 = vmatprep.subr.mxu0 0.0
        %541 = vmatpush1.msra.mxu0 0.0
        %542 = vmatprep.subr.mxu0 0.0
        %543 = vmatpush1.msra.mxu0 0.0
        %544 = vmatprep.subr.mxu0 0.0
        %545 = vmatpush1.msra.mxu0 0.0
        %546 = vmatprep.subr.mxu0 0.0
        %547 = vmatpush1.msra.mxu0 0.0
        %548 = vmatprep.subr.mxu0 0.0
        %549 = vmatpush1.msra.mxu0 0.0
        %550 = vmatprep.subr.mxu0 0.0
        %551 = vmatpush1.msra.mxu0 0.0
        %552 = vmatprep.subr.mxu0 0.0
        %553 = vmatpush1.msra.mxu0 0.0
        %554 = vmatprep.subr.mxu0 0.0
        %555 = vmatpush1.msra.mxu0 0.0
        %556 = vmatprep.subr.mxu0 0.0
        %557 = vmatpush1.msra.mxu0 0.0
        %558 = vmatprep.subr.mxu0 0.0
        %559 = vmatpush1.msra.mxu0 0.0
        %560 = vmatprep.subr.mxu0 0.0
        %561 = vmatpush1.msra.mxu0 0.0
        %562 = vmatprep.subr.mxu0 0.0
        %563 = vmatpush1.msra.mxu0 0.0
        %564 = vmatprep.subr.mxu0 0.0
        %565 = vmatpush1.msra.mxu0 0.0
        %566 = vmatprep.subr.mxu0 0.0
        %567 = vmatpush1.msra.mxu0 0.0
        %568 = vmatprep.subr.mxu0 0.0
        %569 = vmatpush1.msra.mxu0 0.0
        %570 = vmatprep.subr.mxu0 0.0
        %571 = vmatpush1.msra.mxu0 0.0
        %572 = vmatprep.subr.mxu0 0.0
        %573 = vmatpush1.msra.mxu0 0.0
        %574 = vmatprep.subr.mxu0 0.0
        %575 = vmatpush1.msra.mxu0 0.0
        %576 = vmatprep.subr.mxu0 0.0
        %577 = vmatpush1.msra.mxu0 0.0
        %578 = vmatprep.subr.mxu0 0.0
        %579 = vmatpush1.msra.mxu0 0.0
        %580 = vmatprep.subr.mxu0 0.0
        %581 = vmatpush1.msra.mxu0 0.0
        %582 = vmatprep.subr.mxu0 0.0
        %583 = vmatpush1.msra.mxu0 0.0
        %584 = vmatprep.subr.mxu0 0.0
        %585 = vmatpush1.msra.mxu0 0.0
        %586 = vmatprep.subr.mxu0 0.0
        %587 = vmatpush1.msra.mxu0 0.0
        %588 = vmatprep.subr.mxu0 0.0
        %589 = vmatpush1.msra.mxu0 0.0
        %590 = vmatprep.subr.mxu0 0.0
        %591 = vmatpush1.msra.mxu0 0.0
        %592 = vmatprep.mubr.f32.mxu0 0.0
        %593 = vmatmul.mubr.f32.gmra.mrb[0].mxu0 %v520
        %v594 = vpop.f32.mrb[0].mxu0
        %v595 = vadd.f32 0.0, %v594
        %v596 = vpop.f32.mrb[0].mxu0
        %597 = vmatprep.mubr.f32.mxu0 0.0
        %598 = vmatmul.mubr.f32.gmra.mrb[0].mxu0 %v523
        %v599 = vpop.f32.mrb[0].mxu0
        %v600 = vadd.f32 0.0, %v599
        %v601 = vpop.f32.mrb[0].mxu0
        %602 = vdwg.mxu0
        %v603 = vadd.f32 %v510, %v595
        %v604 = vadd.f32 %v515, %v600
        %v605 = vld [vmem:[%s2] sm:$0x1]
        %v607 = vlaneseq
        %v608 = vshrl.u32 %v607, 7
        %v609 = vsub.s32 0, %v608
        %v610 = vrot.slane %v605, %v609
        %v612 = vadd.f32 %v603, %v610
        %v613 = vadd.f32 %v604, %v610
        %v614 = vmax.f32 %v612, 0.0
        %v615 = vmax.f32 %v613, 0.0
        %617 = vset.pattern.permute.xlu0 0
        %618 = vperm.xlu0 %617, %v330
        %v619 = vpop.permute.xlu0 %618
        %622 = vset.pattern.permute.xlu0 0
        %623 = vperm.xlu0 %622, %v331
        %v624 = vpop.permute.xlu0 %623
        %v626 = vmul.f32 %v619, %v614
        %v627 = vmul.f32 %v624, %v615
        %v630 = vrot.slane %v626, 7
        %v631 = vrot.slane %v627, 7
        %v632 = vsel %vm336, %v630, %v631
        %v634 = vsel %vm336, 0.0, %v630
        %v635 = vrot.slane %v626, 1
        %v636 = vrot.slane %v627, 1
        %v637 = vsel %vm342, %v635, %v636
        %v639 = vsel %vm336, %v636, 0.0
        %v640 = vld [vmem:[%s3] sm:$0xff]
        %v641 = vld [vmem:[%s3 + $0x8] sm:$0xff]
        %v642 = vld [vmem:[%s3 + $0x10] sm:$0xff]
        %v643 = vld [vmem:[%s3 + $0x18] sm:$0xff]
        %s644 = scalar_lea.vmem %s3, 32
        %v645 = vld [vmem:[%s644] sm:$0xff]
        %v646 = vld [vmem:[%s644 + $0x8] sm:$0xff]
        %v647 = vld [vmem:[%s644 + $0x10] sm:$0xff]
        %v648 = vld [vmem:[%s644 + $0x18] sm:$0xff]
        %vm649 = vcmask 261120
        %v650 = vsel %vm649, %v626, 0
        %v652 = vsel %vm649, %v627, 0
        %654 = vmatprep.subr.mxu0 0.0
        %655 = vmatpush1.msra.mxu0 %v645
        %656 = vmatprep.subr.mxu0 0.0
        %657 = vmatpush1.msra.mxu0 %v646
        %658 = vmatprep.subr.mxu0 0.0
        %659 = vmatpush1.msra.mxu0 %v647
        %660 = vmatprep.subr.mxu0 0.0
        %661 = vmatpush1.msra.mxu0 %v648
        %662 = vmatprep.subr.mxu0 0.0
        %663 = vmatpush1.msra.mxu0 0.0
        %664 = vmatprep.subr.mxu0 0.0
        %665 = vmatpush1.msra.mxu0 0.0
        %666 = vmatprep.subr.mxu0 0.0
        %667 = vmatpush1.msra.mxu0 0.0
        %668 = vmatprep.subr.mxu0 0.0
        %669 = vmatpush1.msra.mxu0 0.0
        %670 = vmatprep.subr.mxu0 0.0
        %671 = vmatpush1.msra.mxu0 0.0
        %672 = vmatprep.subr.mxu0 0.0
        %673 = vmatpush1.msra.mxu0 0.0
        %674 = vmatprep.subr.mxu0 0.0
        %675 = vmatpush1.msra.mxu0 0.0
        %676 = vmatprep.subr.mxu0 0.0
        %677 = vmatpush1.msra.mxu0 0.0
        %678 = vmatprep.subr.mxu0 0.0
        %679 = vmatpush1.msra.mxu0 0.0
        %680 = vmatprep.subr.mxu0 0.0
        %681 = vmatpush1.msra.mxu0 0.0
        %682 = vmatprep.subr.mxu0 0.0
        %683 = vmatpush1.msra.mxu0 0.0
        %684 = vmatprep.subr.mxu0 0.0
        %685 = vmatpush1.msra.mxu0 0.0
        %686 = vmatprep.subr.mxu0 0.0
        %687 = vmatpush1.msra.mxu0 0.0
        %688 = vmatprep.subr.mxu0 0.0
        %689 = vmatpush1.msra.mxu0 0.0
        %690 = vmatprep.subr.mxu0 0.0
        %691 = vmatpush1.msra.mxu0 0.0
        %692 = vmatprep.subr.mxu0 0.0
        %693 = vmatpush1.msra.mxu0 0.0
        %694 = vmatprep.subr.mxu0 0.0
        %695 = vmatpush1.msra.mxu0 0.0
        %696 = vmatprep.subr.mxu0 0.0
        %697 = vmatpush1.msra.mxu0 0.0
        %698 = vmatprep.subr.mxu0 0.0
        %699 = vmatpush1.msra.mxu0 0.0
        %700 = vmatprep.subr.mxu0 0.0
        %701 = vmatpush1.msra.mxu0 0.0
        %702 = vmatprep.subr.mxu0 0.0
        %703 = vmatpush1.msra.mxu0 0.0
        %704 = vmatprep.subr.mxu0 0.0
        %705 = vmatpush1.msra.mxu0 0.0
        %706 = vmatprep.subr.mxu0 0.0
        %707 = vmatpush1.msra.mxu0 0.0
        %708 = vmatprep.subr.mxu0 0.0
        %709 = vmatpush1.msra.mxu0 0.0
        %710 = vmatprep.subr.mxu0 0.0
        %711 = vmatpush1.msra.mxu0 0.0
        %712 = vmatprep.subr.mxu0 0.0
        %713 = vmatpush1.msra.mxu0 0.0
        %714 = vmatprep.subr.mxu0 0.0
        %715 = vmatpush1.msra.mxu0 0.0
        %716 = vmatprep.subr.mxu0 0.0
        %717 = vmatpush1.msra.mxu0 0.0
        %718 = vmatprep.mubr.f32.mxu0 0.0
        %719 = vmatmul.mubr.f32.gmra.mrb[0].mxu0 %v650
        %v720 = vpop.f32.mrb[0].mxu0
        %v721 = vadd.f32 0.0, %v720
        %v722 = vpop.f32.mrb[0].mxu0
        %723 = vmatprep.mubr.f32.mxu0 0.0
        %724 = vmatmul.mubr.f32.gmra.mrb[0].mxu0 %v652
        %v725 = vpop.f32.mrb[0].mxu0
        %v726 = vadd.f32 0.0, %v725
        %v727 = vpop.f32.mrb[0].mxu0
        %728 = vdwg.mxu0
        %v730 = vsel %vm649, %v634, 0
        %v732 = vsel %vm649, %v632, 0
        %734 = vmatprep.subr.mxu0 0.0
        %735 = vmatpush1.msra.mxu0 %v640
        %736 = vmatprep.subr.mxu0 0.0
        %737 = vmatpush1.msra.mxu0 %v641
        %738 = vmatprep.subr.mxu0 0.0
        %739 = vmatpush1.msra.mxu0 %v642
        %740 = vmatprep.subr.mxu0 0.0
        %741 = vmatpush1.msra.mxu0 %v643
        %742 = vmatprep.subr.mxu0 0.0
        %743 = vmatpush1.msra.mxu0 0.0
        %744 = vmatprep.subr.mxu0 0.0
        %745 = vmatpush1.msra.mxu0 0.0
        %746 = vmatprep.subr.mxu0 0.0
        %747 = vmatpush1.msra.mxu0 0.0
        %748 = vmatprep.subr.mxu0 0.0
        %749 = vmatpush1.msra.mxu0 0.0
        %750 = vmatprep.subr.mxu0 0.0
        %751 = vmatpush1.msra.mxu0 0.0
        %752 = vmatprep.subr.mxu0 0.0
        %753 = vmatpush1.msra.mxu0 0.0
        %754 = vmatprep.subr.mxu0 0.0
        %755 = vmatpush1.msra.mxu0 0.0
        %756 = vmatprep.subr.mxu0 0.0
        %757 = vmatpush1.msra.mxu0 0.0
        %758 = vmatprep.subr.mxu0 0.0
        %759 = vmatpush1.msra.mxu0 0.0
        %760 = vmatprep.subr.mxu0 0.0
        %761 = vmatpush1.msra.mxu0 0.0
        %762 = vmatprep.subr.mxu0 0.0
        %763 = vmatpush1.msra.mxu0 0.0
        %764 = vmatprep.subr.mxu0 0.0
        %765 = vmatpush1.msra.mxu0 0.0
        %766 = vmatprep.subr.mxu0 0.0
        %767 = vmatpush1.msra.mxu0 0.0
        %768 = vmatprep.subr.mxu0 0.0
        %769 = vmatpush1.msra.mxu0 0.0
        %770 = vmatprep.subr.mxu0 0.0
        %771 = vmatpush1.msra.mxu0 0.0
        %772 = vmatprep.subr.mxu0 0.0
        %773 = vmatpush1.msra.mxu0 0.0
        %774 = vmatprep.subr.mxu0 0.0
        %775 = vmatpush1.msra.mxu0 0.0
        %776 = vmatprep.subr.mxu0 0.0
        %777 = vmatpush1.msra.mxu0 0.0
        %778 = vmatprep.subr.mxu0 0.0
        %779 = vmatpush1.msra.mxu0 0.0
        %780 = vmatprep.subr.mxu0 0.0
        %781 = vmatpush1.msra.mxu0 0.0
        %782 = vmatprep.subr.mxu0 0.0
        %783 = vmatpush1.msra.mxu0 0.0
        %784 = vmatprep.subr.mxu0 0.0
        %785 = vmatpush1.msra.mxu0 0.0
        %786 = vmatprep.subr.mxu0 0.0
        %787 = vmatpush1.msra.mxu0 0.0
        %788 = vmatprep.subr.mxu0 0.0
        %789 = vmatpush1.msra.mxu0 0.0
        %790 = vmatprep.subr.mxu0 0.0
        %791 = vmatpush1.msra.mxu0 0.0
        %792 = vmatprep.subr.mxu0 0.0
        %793 = vmatpush1.msra.mxu0 0.0
        %794 = vmatprep.subr.mxu0 0.0
        %795 = vmatpush1.msra.mxu0 0.0
        %796 = vmatprep.subr.mxu0 0.0
        %797 = vmatpush1.msra.mxu0 0.0
        %798 = vmatprep.mubr.f32.mxu0 0.0
        %799 = vmatmul.mubr.f32.gmra.mrb[0].mxu0 %v730
        %v800 = vpop.f32.mrb[0].mxu0
        %v801 = vadd.f32 %v721, %v800
        %v802 = vpop.f32.mrb[0].mxu0
        %803 = vmatprep.mubr.f32.mxu0 0.0
        %804 = vmatmul.mubr.f32.gmra.mrb[0].mxu0 %v732
        %v805 = vpop.f32.mrb[0].mxu0
        %v806 = vadd.f32 %v726, %v805
        %v807 = vpop.f32.mrb[0].mxu0
        %808 = vdwg.mxu0
        %s809 = scalar_lea.vmem %s3, 64
        %v810 = vld [vmem:[%s809] sm:$0xff]
        %v811 = vld [vmem:[%s809 + $0x8] sm:$0xff]
        %v812 = vld [vmem:[%s809 + $0x10] sm:$0xff]
        %v813 = vld [vmem:[%s809 + $0x18] sm:$0xff]
        %v814 = vsel %vm649, %v637, 0
        %v817 = vsel %vm649, %v639, 0
        %819 = vmatprep.subr.mxu0 0.0
        %820 = vmatpush1.msra.mxu0 %v810
        %821 = vmatprep.subr.mxu0 0.0
        %822 = vmatpush1.msra.mxu0 %v811
        %823 = vmatprep.subr.mxu0 0.0
        %824 = vmatpush1.msra.mxu0 %v812
        %825 = vmatprep.subr.mxu0 0.0
        %826 = vmatpush1.msra.mxu0 %v813
        %827 = vmatprep.subr.mxu0 0.0
        %828 = vmatpush1.msra.mxu0 0.0
        %829 = vmatprep.subr.mxu0 0.0
        %830 = vmatpush1.msra.mxu0 0.0
        %831 = vmatprep.subr.mxu0 0.0
        %832 = vmatpush1.msra.mxu0 0.0
        %833 = vmatprep.subr.mxu0 0.0
        %834 = vmatpush1.msra.mxu0 0.0
        %835 = vmatprep.subr.mxu0 0.0
        %836 = vmatpush1.msra.mxu0 0.0
        %837 = vmatprep.subr.mxu0 0.0
        %838 = vmatpush1.msra.mxu0 0.0
        %839 = vmatprep.subr.mxu0 0.0
        %840 = vmatpush1.msra.mxu0 0.0
        %841 = vmatprep.subr.mxu0 0.0
        %842 = vmatpush1.msra.mxu0 0.0
        %843 = vmatprep.subr.mxu0 0.0
        %844 = vmatpush1.msra.mxu0 0.0
        %845 = vmatprep.subr.mxu0 0.0
        %846 = vmatpush1.msra.mxu0 0.0
        %847 = vmatprep.subr.mxu0 0.0
        %848 = vmatpush1.msra.mxu0 0.0
        %849 = vmatprep.subr.mxu0 0.0
        %850 = vmatpush1.msra.mxu0 0.0
        %851 = vmatprep.subr.mxu0 0.0
        %852 = vmatpush1.msra.mxu0 0.0
        %853 = vmatprep.subr.mxu0 0.0
        %854 = vmatpush1.msra.mxu0 0.0
        %855 = vmatprep.subr.mxu0 0.0
        %856 = vmatpush1.msra.mxu0 0.0
        %857 = vmatprep.subr.mxu0 0.0
        %858 = vmatpush1.msra.mxu0 0.0
        %859 = vmatprep.subr.mxu0 0.0
        %860 = vmatpush1.msra.mxu0 0.0
        %861 = vmatprep.subr.mxu0 0.0
        %862 = vmatpush1.msra.mxu0 0.0
        %863 = vmatprep.subr.mxu0 0.0
        %864 = vmatpush1.msra.mxu0 0.0
        %865 = vmatprep.subr.mxu0 0.0
        %866 = vmatpush1.msra.mxu0 0.0
        %867 = vmatprep.subr.mxu0 0.0
        %868 = vmatpush1.msra.mxu0 0.0
        %869 = vmatprep.subr.mxu0 0.0
        %870 = vmatpush1.msra.mxu0 0.0
        %871 = vmatprep.subr.mxu0 0.0
        %872 = vmatpush1.msra.mxu0 0.0
        %873 = vmatprep.subr.mxu0 0.0
        %874 = vmatpush1.msra.mxu0 0.0
        %875 = vmatprep.subr.mxu0 0.0
        %876 = vmatpush1.msra.mxu0 0.0
        %877 = vmatprep.subr.mxu0 0.0
        %878 = vmatpush1.msra.mxu0 0.0
        %879 = vmatprep.subr.mxu0 0.0
        %880 = vmatpush1.msra.mxu0 0.0
        %881 = vmatprep.subr.mxu0 0.0
        %882 = vmatpush1.msra.mxu0 0.0
        %883 = vmatprep.mubr.f32.mxu0 0.0
        %884 = vmatmul.mubr.f32.gmra.mrb[0].mxu0 %v814
        %v885 = vpop.f32.mrb[0].mxu0
        %v886 = vadd.f32 0.0, %v885
        %v887 = vpop.f32.mrb[0].mxu0
        %888 = vmatprep.mubr.f32.mxu0 0.0
        %889 = vmatmul.mubr.f32.gmra.mrb[0].mxu0 %v817
        %v890 = vpop.f32.mrb[0].mxu0
        %v891 = vadd.f32 0.0, %v890
        %v892 = vpop.f32.mrb[0].mxu0
        %893 = vdwg.mxu0
        %v894 = vadd.f32 %v801, %v886
        %v895 = vadd.f32 %v806, %v891
        %v896 = vld [vmem:[%s4] sm:$0x1]
        %v898 = vlaneseq
        %v899 = vshrl.u32 %v898, 7
        %v900 = vsub.s32 0, %v899
        %v901 = vrot.slane %v896, %v900
        %v903 = vadd.f32 %v894, %v901
        %v904 = vadd.f32 %v895, %v901
        %v905 = vmax.f32 %v903, 0.0
        %v906 = vmax.f32 %v904, 0.0
        %v907 = vmul.f32 %v619, %v905
        %v908 = vmul.f32 %v624, %v906
        %v909 = vld [vmem:[%s8] sm:$0xff]
        %vm910 = vcmask 80896
        %v912 = vsel %vm910, %v909, 0
        %vm914 = vcmask 1041408
        %v916 = vsel %vm914, %v908, 0
        %918 = vmatprep.subr.mxu0 0.0
        %919 = vmatpush1.msra.mxu0 %v907
        %920 = vmatprep.subr.mxu0 0.0
        %921 = vmatpush1.msra.mxu0 %v916
        %922 = vmatprep.subr.mxu0 0.0
        %923 = vmatpush1.msra.mxu0 0.0
        %924 = vmatprep.subr.mxu0 0.0
        %925 = vmatpush1.msra.mxu0 0.0
        %926 = vmatprep.subr.mxu0 0.0
        %927 = vmatpush1.msra.mxu0 0.0
        %928 = vmatprep.subr.mxu0 0.0
        %929 = vmatpush1.msra.mxu0 0.0
        %930 = vmatprep.subr.mxu0 0.0
        %931 = vmatpush1.msra.mxu0 0.0
        %932 = vmatprep.subr.mxu0 0.0
        %933 = vmatpush1.msra.mxu0 0.0
        %934 = vmatprep.subr.mxu0 0.0
        %935 = vmatpush1.msra.mxu0 0.0
        %936 = vmatprep.subr.mxu0 0.0
        %937 = vmatpush1.msra.mxu0 0.0
        %938 = vmatprep.subr.mxu0 0.0
        %939 = vmatpush1.msra.mxu0 0.0
        %940 = vmatprep.subr.mxu0 0.0
        %941 = vmatpush1.msra.mxu0 0.0
        %942 = vmatprep.subr.mxu0 0.0
        %943 = vmatpush1.msra.mxu0 0.0
        %944 = vmatprep.subr.mxu0 0.0
        %945 = vmatpush1.msra.mxu0 0.0
        %946 = vmatprep.subr.mxu0 0.0
        %947 = vmatpush1.msra.mxu0 0.0
        %948 = vmatprep.subr.mxu0 0.0
        %949 = vmatpush1.msra.mxu0 0.0
        %950 = vmatprep.subr.mxu0 0.0
        %951 = vmatpush1.msra.mxu0 0.0
        %952 = vmatprep.subr.mxu0 0.0
        %953 = vmatpush1.msra.mxu0 0.0
        %954 = vmatprep.subr.mxu0 0.0
        %955 = vmatpush1.msra.mxu0 0.0
        %956 = vmatprep.subr.mxu0 0.0
        %957 = vmatpush1.msra.mxu0 0.0
        %958 = vmatprep.subr.mxu0 0.0
        %959 = vmatpush1.msra.mxu0 0.0
        %960 = vmatprep.subr.mxu0 0.0
        %961 = vmatpush1.msra.mxu0 0.0
        %962 = vmatprep.subr.mxu0 0.0
        %963 = vmatpush1.msra.mxu0 0.0
        %964 = vmatprep.subr.mxu0 0.0
        %965 = vmatpush1.msra.mxu0 0.0
        %966 = vmatprep.subr.mxu0 0.0
        %967 = vmatpush1.msra.mxu0 0.0
        %968 = vmatprep.subr.mxu0 0.0
        %969 = vmatpush1.msra.mxu0 0.0
        %970 = vmatprep.subr.mxu0 0.0
        %971 = vmatpush1.msra.mxu0 0.0
        %972 = vmatprep.subr.mxu0 0.0
        %973 = vmatpush1.msra.mxu0 0.0
        %974 = vmatprep.subr.mxu0 0.0
        %975 = vmatpush1.msra.mxu0 0.0
        %976 = vmatprep.subr.mxu0 0.0
        %977 = vmatpush1.msra.mxu0 0.0
        %978 = vmatprep.subr.mxu0 0.0
        %979 = vmatpush1.msra.mxu0 0.0
        %980 = vmatprep.subr.mxu0 0.0
        %981 = vmatpush1.msra.mxu0 0.0
        %982 = vmatprep.mubr.f32.mxu0 0.0
        %983 = vmatmul.mubr.f32.gmra.mrb[0].mxu0 %v912
        %v984 = vpop.f32.mrb[0].mxu0
        %v985 = vadd.f32 0.0, %v984
        %v986 = vpop.f32.mrb[0].mxu0
        %987 = vdwg.mxu0
        %v988 = vld [vmem:[%s5] sm:$0xff]
        %v989 = vld [vmem:[%s5 + $0x8] sm:$0xff]
        %v990 = vld [vmem:[%s5 + $0x10] sm:$0xff]
        %v991 = vld [vmem:[%s5 + $0x18] sm:$0xff]
        %s992 = scalar_lea.vmem %s5, 32
        %v993 = vld [vmem:[%s992] sm:$0xff]
        %v994 = vld [vmem:[%s992 + $0x8] sm:$0xff]
        %v995 = vld [vmem:[%s992 + $0x10] sm:$0xff]
        %v996 = vld [vmem:[%s992 + $0x18] sm:$0xff]
        %v998 = vrot.slane %v985, 1
        %v999 = vsel %vm649, %v998, 0
        %1001 = vmatprep.subr.mxu0 0.0
        %1002 = vmatpush1.msra.mxu0 %v993
        %1003 = vmatprep.subr.mxu0 0.0
        %1004 = vmatpush1.msra.mxu0 %v994
        %1005 = vmatprep.subr.mxu0 0.0
        %1006 = vmatpush1.msra.mxu0 %v995
        %1007 = vmatprep.subr.mxu0 0.0
        %1008 = vmatpush1.msra.mxu0 %v996
        %1009 = vmatprep.subr.mxu0 0.0
        %1010 = vmatpush1.msra.mxu0 0.0
        %1011 = vmatprep.subr.mxu0 0.0
        %1012 = vmatpush1.msra.mxu0 0.0
        %1013 = vmatprep.subr.mxu0 0.0
        %1014 = vmatpush1.msra.mxu0 0.0
        %1015 = vmatprep.subr.mxu0 0.0
        %1016 = vmatpush1.msra.mxu0 0.0
        %1017 = vmatprep.subr.mxu0 0.0
        %1018 = vmatpush1.msra.mxu0 0.0
        %1019 = vmatprep.subr.mxu0 0.0
        %1020 = vmatpush1.msra.mxu0 0.0
        %1021 = vmatprep.subr.mxu0 0.0
        %1022 = vmatpush1.msra.mxu0 0.0
        %1023 = vmatprep.subr.mxu0 0.0
        %1024 = vmatpush1.msra.mxu0 0.0
        %1025 = vmatprep.subr.mxu0 0.0
        %1026 = vmatpush1.msra.mxu0 0.0
        %1027 = vmatprep.subr.mxu0 0.0
        %1028 = vmatpush1.msra.mxu0 0.0
        %1029 = vmatprep.subr.mxu0 0.0
        %1030 = vmatpush1.msra.mxu0 0.0
        %1031 = vmatprep.subr.mxu0 0.0
        %1032 = vmatpush1.msra.mxu0 0.0
        %1033 = vmatprep.subr.mxu0 0.0
        %1034 = vmatpush1.msra.mxu0 0.0
        %1035 = vmatprep.subr.mxu0 0.0
        %1036 = vmatpush1.msra.mxu0 0.0
        %1037 = vmatprep.subr.mxu0 0.0
        %1038 = vmatpush1.msra.mxu0 0.0
        %1039 = vmatprep.subr.mxu0 0.0
        %1040 = vmatpush1.msra.mxu0 0.0
        %1041 = vmatprep.subr.mxu0 0.0
        %1042 = vmatpush1.msra.mxu0 0.0
        %1043 = vmatprep.subr.mxu0 0.0
        %1044 = vmatpush1.msra.mxu0 0.0
        %1045 = vmatprep.subr.mxu0 0.0
        %1046 = vmatpush1.msra.mxu0 0.0
        %1047 = vmatprep.subr.mxu0 0.0
        %1048 = vmatpush1.msra.mxu0 0.0
        %1049 = vmatprep.subr.mxu0 0.0
        %1050 = vmatpush1.msra.mxu0 0.0
        %1051 = vmatprep.subr.mxu0 0.0
        %1052 = vmatpush1.msra.mxu0 0.0
        %1053 = vmatprep.subr.mxu0 0.0
        %1054 = vmatpush1.msra.mxu0 0.0
        %1055 = vmatprep.subr.mxu0 0.0
        %1056 = vmatpush1.msra.mxu0 0.0
        %1057 = vmatprep.subr.mxu0 0.0
        %1058 = vmatpush1.msra.mxu0 0.0
        %1059 = vmatprep.subr.mxu0 0.0
        %1060 = vmatpush1.msra.mxu0 0.0
        %1061 = vmatprep.subr.mxu0 0.0
        %1062 = vmatpush1.msra.mxu0 0.0
        %1063 = vmatprep.subr.mxu0 0.0
        %1064 = vmatpush1.msra.mxu0 0.0
        %1065 = vmatprep.mubr.f32.mxu0 0.0
        %1066 = vmatmul.mubr.f32.gmra.mrb[0].mxu0 %v999
        %v1067 = vpop.f32.mrb[0].mxu0
        %v1068 = vadd.f32 0.0, %v1067
        %v1069 = vpop.f32.mrb[0].mxu0
        %1070 = vdwg.mxu0
        %v1071 = vsel %vm649, %v985, 0
        %1073 = vmatprep.subr.mxu0 0.0
        %1074 = vmatpush1.msra.mxu0 %v988
        %1075 = vmatprep.subr.mxu0 0.0
        %1076 = vmatpush1.msra.mxu0 %v989
        %1077 = vmatprep.subr.mxu0 0.0
        %1078 = vmatpush1.msra.mxu0 %v990
        %1079 = vmatprep.subr.mxu0 0.0
        %1080 = vmatpush1.msra.mxu0 %v991
        %1081 = vmatprep.subr.mxu0 0.0
        %1082 = vmatpush1.msra.mxu0 0.0
        %1083 = vmatprep.subr.mxu0 0.0
        %1084 = vmatpush1.msra.mxu0 0.0
        %1085 = vmatprep.subr.mxu0 0.0
        %1086 = vmatpush1.msra.mxu0 0.0
        %1087 = vmatprep.subr.mxu0 0.0
        %1088 = vmatpush1.msra.mxu0 0.0
        %1089 = vmatprep.subr.mxu0 0.0
        %1090 = vmatpush1.msra.mxu0 0.0
        %1091 = vmatprep.subr.mxu0 0.0
        %1092 = vmatpush1.msra.mxu0 0.0
        %1093 = vmatprep.subr.mxu0 0.0
        %1094 = vmatpush1.msra.mxu0 0.0
        %1095 = vmatprep.subr.mxu0 0.0
        %1096 = vmatpush1.msra.mxu0 0.0
        %1097 = vmatprep.subr.mxu0 0.0
        %1098 = vmatpush1.msra.mxu0 0.0
        %1099 = vmatprep.subr.mxu0 0.0
        %1100 = vmatpush1.msra.mxu0 0.0
        %1101 = vmatprep.subr.mxu0 0.0
        %1102 = vmatpush1.msra.mxu0 0.0
        %1103 = vmatprep.subr.mxu0 0.0
        %1104 = vmatpush1.msra.mxu0 0.0
        %1105 = vmatprep.subr.mxu0 0.0
        %1106 = vmatpush1.msra.mxu0 0.0
        %1107 = vmatprep.subr.mxu0 0.0
        %1108 = vmatpush1.msra.mxu0 0.0
        %1109 = vmatprep.subr.mxu0 0.0
        %1110 = vmatpush1.msra.mxu0 0.0
        %1111 = vmatprep.subr.mxu0 0.0
        %1112 = vmatpush1.msra.mxu0 0.0
        %1113 = vmatprep.subr.mxu0 0.0
        %1114 = vmatpush1.msra.mxu0 0.0
        %1115 = vmatprep.subr.mxu0 0.0
        %1116 = vmatpush1.msra.mxu0 0.0
        %1117 = vmatprep.subr.mxu0 0.0
        %1118 = vmatpush1.msra.mxu0 0.0
        %1119 = vmatprep.subr.mxu0 0.0
        %1120 = vmatpush1.msra.mxu0 0.0
        %1121 = vmatprep.subr.mxu0 0.0
        %1122 = vmatpush1.msra.mxu0 0.0
        %1123 = vmatprep.subr.mxu0 0.0
        %1124 = vmatpush1.msra.mxu0 0.0
        %1125 = vmatprep.subr.mxu0 0.0
        %1126 = vmatpush1.msra.mxu0 0.0
        %1127 = vmatprep.subr.mxu0 0.0
        %1128 = vmatpush1.msra.mxu0 0.0
        %1129 = vmatprep.subr.mxu0 0.0
        %1130 = vmatpush1.msra.mxu0 0.0
        %1131 = vmatprep.subr.mxu0 0.0
        %1132 = vmatpush1.msra.mxu0 0.0
        %1133 = vmatprep.subr.mxu0 0.0
        %1134 = vmatpush1.msra.mxu0 0.0
        %1135 = vmatprep.subr.mxu0 0.0
        %1136 = vmatpush1.msra.mxu0 0.0
        %1137 = vmatprep.mubr.f32.mxu0 0.0
        %1138 = vmatmul.mubr.f32.gmra.mrb[0].mxu0 %v1071
        %v1139 = vpop.f32.mrb[0].mxu0
        %v1140 = vadd.f32 %v1068, %v1139
        %v1141 = vpop.f32.mrb[0].mxu0
        %1142 = vdwg.mxu0
        %s1143 = scalar_lea.vmem %s5, 64
        %v1144 = vld [vmem:[%s1143] sm:$0xff]
        %v1145 = vld [vmem:[%s1143 + $0x8] sm:$0xff]
        %v1146 = vld [vmem:[%s1143 + $0x10] sm:$0xff]
        %v1147 = vld [vmem:[%s1143 + $0x18] sm:$0xff]
        %v1148 = vrot.slane %v985, 2
        %v1149 = vsel %vm649, %v1148, 0
        %1151 = vmatprep.subr.mxu0 0.0
        %1152 = vmatpush1.msra.mxu0 %v1144
        %1153 = vmatprep.subr.mxu0 0.0
        %1154 = vmatpush1.msra.mxu0 %v1145
        %1155 = vmatprep.subr.mxu0 0.0
        %1156 = vmatpush1.msra.mxu0 %v1146
        %1157 = vmatprep.subr.mxu0 0.0
        %1158 = vmatpush1.msra.mxu0 %v1147
        %1159 = vmatprep.subr.mxu0 0.0
        %1160 = vmatpush1.msra.mxu0 0.0
        %1161 = vmatprep.subr.mxu0 0.0
        %1162 = vmatpush1.msra.mxu0 0.0
        %1163 = vmatprep.subr.mxu0 0.0
        %1164 = vmatpush1.msra.mxu0 0.0
        %1165 = vmatprep.subr.mxu0 0.0
        %1166 = vmatpush1.msra.mxu0 0.0
        %1167 = vmatprep.subr.mxu0 0.0
        %1168 = vmatpush1.msra.mxu0 0.0
        %1169 = vmatprep.subr.mxu0 0.0
        %1170 = vmatpush1.msra.mxu0 0.0
        %1171 = vmatprep.subr.mxu0 0.0
        %1172 = vmatpush1.msra.mxu0 0.0
        %1173 = vmatprep.subr.mxu0 0.0
        %1174 = vmatpush1.msra.mxu0 0.0
        %1175 = vmatprep.subr.mxu0 0.0
        %1176 = vmatpush1.msra.mxu0 0.0
        %1177 = vmatprep.subr.mxu0 0.0
        %1178 = vmatpush1.msra.mxu0 0.0
        %1179 = vmatprep.subr.mxu0 0.0
        %1180 = vmatpush1.msra.mxu0 0.0
        %1181 = vmatprep.subr.mxu0 0.0
        %1182 = vmatpush1.msra.mxu0 0.0
        %1183 = vmatprep.subr.mxu0 0.0
        %1184 = vmatpush1.msra.mxu0 0.0
        %1185 = vmatprep.subr.mxu0 0.0
        %1186 = vmatpush1.msra.mxu0 0.0
        %1187 = vmatprep.subr.mxu0 0.0
        %1188 = vmatpush1.msra.mxu0 0.0
        %1189 = vmatprep.subr.mxu0 0.0
        %1190 = vmatpush1.msra.mxu0 0.0
        %1191 = vmatprep.subr.mxu0 0.0
        %1192 = vmatpush1.msra.mxu0 0.0
        %1193 = vmatprep.subr.mxu0 0.0
        %1194 = vmatpush1.msra.mxu0 0.0
        %1195 = vmatprep.subr.mxu0 0.0
        %1196 = vmatpush1.msra.mxu0 0.0
        %1197 = vmatprep.subr.mxu0 0.0
        %1198 = vmatpush1.msra.mxu0 0.0
        %1199 = vmatprep.subr.mxu0 0.0
        %1200 = vmatpush1.msra.mxu0 0.0
        %1201 = vmatprep.subr.mxu0 0.0
        %1202 = vmatpush1.msra.mxu0 0.0
        %1203 = vmatprep.subr.mxu0 0.0
        %1204 = vmatpush1.msra.mxu0 0.0
        %1205 = vmatprep.subr.mxu0 0.0
        %1206 = vmatpush1.msra.mxu0 0.0
        %1207 = vmatprep.subr.mxu0 0.0
        %1208 = vmatpush1.msra.mxu0 0.0
        %1209 = vmatprep.subr.mxu0 0.0
        %1210 = vmatpush1.msra.mxu0 0.0
        %1211 = vmatprep.subr.mxu0 0.0
        %1212 = vmatpush1.msra.mxu0 0.0
        %1213 = vmatprep.subr.mxu0 0.0
        %1214 = vmatpush1.msra.mxu0 0.0
        %1215 = vmatprep.mubr.f32.mxu0 0.0
        %1216 = vmatmul.mubr.f32.gmra.mrb[0].mxu0 %v1149
        %v1217 = vpop.f32.mrb[0].mxu0
        %v1218 = vadd.f32 0.0, %v1217
        %v1219 = vpop.f32.mrb[0].mxu0
        %1220 = vdwg.mxu0
        %v1221 = vadd.f32 %v1140, %v1218
        %s1222 = scalar_lea.vmem %s5, 96
        %v1223 = vld [vmem:[%s1222] sm:$0xff]
        %v1224 = vld [vmem:[%s1222 + $0x8] sm:$0xff]
        %v1225 = vld [vmem:[%s1222 + $0x10] sm:$0xff]
        %v1226 = vld [vmem:[%s1222 + $0x18] sm:$0xff]
        %v1227 = vrot.slane %v985, 3
        %v1228 = vsel %vm649, %v1227, 0
        %1230 = vmatprep.subr.mxu0 0.0
        %1231 = vmatpush1.msra.mxu0 %v1223
        %1232 = vmatprep.subr.mxu0 0.0
        %1233 = vmatpush1.msra.mxu0 %v1224
        %1234 = vmatprep.subr.mxu0 0.0
        %1235 = vmatpush1.msra.mxu0 %v1225
        %1236 = vmatprep.subr.mxu0 0.0
        %1237 = vmatpush1.msra.mxu0 %v1226
        %1238 = vmatprep.subr.mxu0 0.0
        %1239 = vmatpush1.msra.mxu0 0.0
        %1240 = vmatprep.subr.mxu0 0.0
        %1241 = vmatpush1.msra.mxu0 0.0
        %1242 = vmatprep.subr.mxu0 0.0
        %1243 = vmatpush1.msra.mxu0 0.0
        %1244 = vmatprep.subr.mxu0 0.0
        %1245 = vmatpush1.msra.mxu0 0.0
        %1246 = vmatprep.subr.mxu0 0.0
        %1247 = vmatpush1.msra.mxu0 0.0
        %1248 = vmatprep.subr.mxu0 0.0
        %1249 = vmatpush1.msra.mxu0 0.0
        %1250 = vmatprep.subr.mxu0 0.0
        %1251 = vmatpush1.msra.mxu0 0.0
        %1252 = vmatprep.subr.mxu0 0.0
        %1253 = vmatpush1.msra.mxu0 0.0
        %1254 = vmatprep.subr.mxu0 0.0
        %1255 = vmatpush1.msra.mxu0 0.0
        %1256 = vmatprep.subr.mxu0 0.0
        %1257 = vmatpush1.msra.mxu0 0.0
        %1258 = vmatprep.subr.mxu0 0.0
        %1259 = vmatpush1.msra.mxu0 0.0
        %1260 = vmatprep.subr.mxu0 0.0
        %1261 = vmatpush1.msra.mxu0 0.0
        %1262 = vmatprep.subr.mxu0 0.0
        %1263 = vmatpush1.msra.mxu0 0.0
        %1264 = vmatprep.subr.mxu0 0.0
        %1265 = vmatpush1.msra.mxu0 0.0
        %1266 = vmatprep.subr.mxu0 0.0
        %1267 = vmatpush1.msra.mxu0 0.0
        %1268 = vmatprep.subr.mxu0 0.0
        %1269 = vmatpush1.msra.mxu0 0.0
        %1270 = vmatprep.subr.mxu0 0.0
        %1271 = vmatpush1.msra.mxu0 0.0
        %1272 = vmatprep.subr.mxu0 0.0
        %1273 = vmatpush1.msra.mxu0 0.0
        %1274 = vmatprep.subr.mxu0 0.0
        %1275 = vmatpush1.msra.mxu0 0.0
        %1276 = vmatprep.subr.mxu0 0.0
        %1277 = vmatpush1.msra.mxu0 0.0
        %1278 = vmatprep.subr.mxu0 0.0
        %1279 = vmatpush1.msra.mxu0 0.0
        %1280 = vmatprep.subr.mxu0 0.0
        %1281 = vmatpush1.msra.mxu0 0.0
        %1282 = vmatprep.subr.mxu0 0.0
        %1283 = vmatpush1.msra.mxu0 0.0
        %1284 = vmatprep.subr.mxu0 0.0
        %1285 = vmatpush1.msra.mxu0 0.0
        %1286 = vmatprep.subr.mxu0 0.0
        %1287 = vmatpush1.msra.mxu0 0.0
        %1288 = vmatprep.subr.mxu0 0.0
        %1289 = vmatpush1.msra.mxu0 0.0
        %1290 = vmatprep.subr.mxu0 0.0
        %1291 = vmatpush1.msra.mxu0 0.0
        %1292 = vmatprep.subr.mxu0 0.0
        %1293 = vmatpush1.msra.mxu0 0.0
        %1294 = vmatprep.mubr.f32.mxu0 0.0
        %1295 = vmatmul.mubr.f32.gmra.mrb[0].mxu0 %v1228
        %v1296 = vpop.f32.mrb[0].mxu0
        %v1297 = vadd.f32 0.0, %v1296
        %v1298 = vpop.f32.mrb[0].mxu0
        %1299 = vdwg.mxu0
        %v1300 = vadd.f32 %v1221, %v1297
        %s1301 = scalar_lea.vmem %s5, 128
        %v1302 = vld [vmem:[%s1301] sm:$0xff]
        %v1303 = vld [vmem:[%s1301 + $0x8] sm:$0xff]
        %v1304 = vld [vmem:[%s1301 + $0x10] sm:$0xff]
        %v1305 = vld [vmem:[%s1301 + $0x18] sm:$0xff]
        %v1306 = vrot.slane %v985, 4
        %v1307 = vsel %vm649, %v1306, 0
        %1309 = vmatprep.subr.mxu0 0.0
        %1310 = vmatpush1.msra.mxu0 %v1302
        %1311 = vmatprep.subr.mxu0 0.0
        %1312 = vmatpush1.msra.mxu0 %v1303
        %1313 = vmatprep.subr.mxu0 0.0
        %1314 = vmatpush1.msra.mxu0 %v1304
        %1315 = vmatprep.subr.mxu0 0.0
        %1316 = vmatpush1.msra.mxu0 %v1305
        %1317 = vmatprep.subr.mxu0 0.0
        %1318 = vmatpush1.msra.mxu0 0.0
        %1319 = vmatprep.subr.mxu0 0.0
        %1320 = vmatpush1.msra.mxu0 0.0
        %1321 = vmatprep.subr.mxu0 0.0
        %1322 = vmatpush1.msra.mxu0 0.0
        %1323 = vmatprep.subr.mxu0 0.0
        %1324 = vmatpush1.msra.mxu0 0.0
        %1325 = vmatprep.subr.mxu0 0.0
        %1326 = vmatpush1.msra.mxu0 0.0
        %1327 = vmatprep.subr.mxu0 0.0
        %1328 = vmatpush1.msra.mxu0 0.0
        %1329 = vmatprep.subr.mxu0 0.0
        %1330 = vmatpush1.msra.mxu0 0.0
        %1331 = vmatprep.subr.mxu0 0.0
        %1332 = vmatpush1.msra.mxu0 0.0
        %1333 = vmatprep.subr.mxu0 0.0
        %1334 = vmatpush1.msra.mxu0 0.0
        %1335 = vmatprep.subr.mxu0 0.0
        %1336 = vmatpush1.msra.mxu0 0.0
        %1337 = vmatprep.subr.mxu0 0.0
        %1338 = vmatpush1.msra.mxu0 0.0
        %1339 = vmatprep.subr.mxu0 0.0
        %1340 = vmatpush1.msra.mxu0 0.0
        %1341 = vmatprep.subr.mxu0 0.0
        %1342 = vmatpush1.msra.mxu0 0.0
        %1343 = vmatprep.subr.mxu0 0.0
        %1344 = vmatpush1.msra.mxu0 0.0
        %1345 = vmatprep.subr.mxu0 0.0
        %1346 = vmatpush1.msra.mxu0 0.0
        %1347 = vmatprep.subr.mxu0 0.0
        %1348 = vmatpush1.msra.mxu0 0.0
        %1349 = vmatprep.subr.mxu0 0.0
        %1350 = vmatpush1.msra.mxu0 0.0
        %1351 = vmatprep.subr.mxu0 0.0
        %1352 = vmatpush1.msra.mxu0 0.0
        %1353 = vmatprep.subr.mxu0 0.0
        %1354 = vmatpush1.msra.mxu0 0.0
        %1355 = vmatprep.subr.mxu0 0.0
        %1356 = vmatpush1.msra.mxu0 0.0
        %1357 = vmatprep.subr.mxu0 0.0
        %1358 = vmatpush1.msra.mxu0 0.0
        %1359 = vmatprep.subr.mxu0 0.0
        %1360 = vmatpush1.msra.mxu0 0.0
        %1361 = vmatprep.subr.mxu0 0.0
        %1362 = vmatpush1.msra.mxu0 0.0
        %1363 = vmatprep.subr.mxu0 0.0
        %1364 = vmatpush1.msra.mxu0 0.0
        %1365 = vmatprep.subr.mxu0 0.0
        %1366 = vmatpush1.msra.mxu0 0.0
        %1367 = vmatprep.subr.mxu0 0.0
        %1368 = vmatpush1.msra.mxu0 0.0
        %1369 = vmatprep.subr.mxu0 0.0
        %1370 = vmatpush1.msra.mxu0 0.0
        %1371 = vmatprep.subr.mxu0 0.0
        %1372 = vmatpush1.msra.mxu0 0.0
        %1373 = vmatprep.mubr.f32.mxu0 0.0
        %1374 = vmatmul.mubr.f32.gmra.mrb[0].mxu0 %v1307
        %v1375 = vpop.f32.mrb[0].mxu0
        %v1376 = vadd.f32 0.0, %v1375
        %v1377 = vpop.f32.mrb[0].mxu0
        %1378 = vdwg.mxu0
        %v1379 = vadd.f32 %v1300, %v1376
        %s1380 = scalar_lea.vmem %s5, 160
        %v1381 = vld [vmem:[%s1380] sm:$0xff]
        %v1382 = vld [vmem:[%s1380 + $0x8] sm:$0xff]
        %v1383 = vld [vmem:[%s1380 + $0x10] sm:$0xff]
        %v1384 = vld [vmem:[%s1380 + $0x18] sm:$0xff]
        %v1385 = vrot.slane %v985, 5
        %v1386 = vsel %vm649, %v1385, 0
        %1388 = vmatprep.subr.mxu0 0.0
        %1389 = vmatpush1.msra.mxu0 %v1381
        %1390 = vmatprep.subr.mxu0 0.0
        %1391 = vmatpush1.msra.mxu0 %v1382
        %1392 = vmatprep.subr.mxu0 0.0
        %1393 = vmatpush1.msra.mxu0 %v1383
        %1394 = vmatprep.subr.mxu0 0.0
        %1395 = vmatpush1.msra.mxu0 %v1384
        %1396 = vmatprep.subr.mxu0 0.0
        %1397 = vmatpush1.msra.mxu0 0.0
        %1398 = vmatprep.subr.mxu0 0.0
        %1399 = vmatpush1.msra.mxu0 0.0
        %1400 = vmatprep.subr.mxu0 0.0
        %1401 = vmatpush1.msra.mxu0 0.0
        %1402 = vmatprep.subr.mxu0 0.0
        %1403 = vmatpush1.msra.mxu0 0.0
        %1404 = vmatprep.subr.mxu0 0.0
        %1405 = vmatpush1.msra.mxu0 0.0
        %1406 = vmatprep.subr.mxu0 0.0
        %1407 = vmatpush1.msra.mxu0 0.0
        %1408 = vmatprep.subr.mxu0 0.0
        %1409 = vmatpush1.msra.mxu0 0.0
        %1410 = vmatprep.subr.mxu0 0.0
        %1411 = vmatpush1.msra.mxu0 0.0
        %1412 = vmatprep.subr.mxu0 0.0
        %1413 = vmatpush1.msra.mxu0 0.0
        %1414 = vmatprep.subr.mxu0 0.0
        %1415 = vmatpush1.msra.mxu0 0.0
        %1416 = vmatprep.subr.mxu0 0.0
        %1417 = vmatpush1.msra.mxu0 0.0
        %1418 = vmatprep.subr.mxu0 0.0
        %1419 = vmatpush1.msra.mxu0 0.0
        %1420 = vmatprep.subr.mxu0 0.0
        %1421 = vmatpush1.msra.mxu0 0.0
        %1422 = vmatprep.subr.mxu0 0.0
        %1423 = vmatpush1.msra.mxu0 0.0
        %1424 = vmatprep.subr.mxu0 0.0
        %1425 = vmatpush1.msra.mxu0 0.0
        %1426 = vmatprep.subr.mxu0 0.0
        %1427 = vmatpush1.msra.mxu0 0.0
        %1428 = vmatprep.subr.mxu0 0.0
        %1429 = vmatpush1.msra.mxu0 0.0
        %1430 = vmatprep.subr.mxu0 0.0
        %1431 = vmatpush1.msra.mxu0 0.0
        %1432 = vmatprep.subr.mxu0 0.0
        %1433 = vmatpush1.msra.mxu0 0.0
        %1434 = vmatprep.subr.mxu0 0.0
        %1435 = vmatpush1.msra.mxu0 0.0
        %1436 = vmatprep.subr.mxu0 0.0
        %1437 = vmatpush1.msra.mxu0 0.0
        %1438 = vmatprep.subr.mxu0 0.0
        %1439 = vmatpush1.msra.mxu0 0.0
        %1440 = vmatprep.subr.mxu0 0.0
        %1441 = vmatpush1.msra.mxu0 0.0
        %1442 = vmatprep.subr.mxu0 0.0
        %1443 = vmatpush1.msra.mxu0 0.0
        %1444 = vmatprep.subr.mxu0 0.0
        %1445 = vmatpush1.msra.mxu0 0.0
        %1446 = vmatprep.subr.mxu0 0.0
        %1447 = vmatpush1.msra.mxu0 0.0
        %1448 = vmatprep.subr.mxu0 0.0
        %1449 = vmatpush1.msra.mxu0 0.0
        %1450 = vmatprep.subr.mxu0 0.0
        %1451 = vmatpush1.msra.mxu0 0.0
        %1452 = vmatprep.mubr.f32.mxu0 0.0
        %1453 = vmatmul.mubr.f32.gmra.mrb[0].mxu0 %v1386
        %v1454 = vpop.f32.mrb[0].mxu0
        %v1455 = vadd.f32 0.0, %v1454
        %v1456 = vpop.f32.mrb[0].mxu0
        %1457 = vdwg.mxu0
        %v1458 = vadd.f32 %v1379, %v1455
        %s1459 = scalar_lea.vmem %s5, 192
        %v1460 = vld [vmem:[%s1459] sm:$0xff]
        %v1461 = vld [vmem:[%s1459 + $0x8] sm:$0xff]
        %v1462 = vld [vmem:[%s1459 + $0x10] sm:$0xff]
        %v1463 = vld [vmem:[%s1459 + $0x18] sm:$0xff]
        %v1464 = vrot.slane %v985, 6
        %v1465 = vsel %vm649, %v1464, 0
        %1467 = vmatprep.subr.mxu0 0.0
        %1468 = vmatpush1.msra.mxu0 %v1460
        %1469 = vmatprep.subr.mxu0 0.0
        %1470 = vmatpush1.msra.mxu0 %v1461
        %1471 = vmatprep.subr.mxu0 0.0
        %1472 = vmatpush1.msra.mxu0 %v1462
        %1473 = vmatprep.subr.mxu0 0.0
        %1474 = vmatpush1.msra.mxu0 %v1463
        %1475 = vmatprep.subr.mxu0 0.0
        %1476 = vmatpush1.msra.mxu0 0.0
        %1477 = vmatprep.subr.mxu0 0.0
        %1478 = vmatpush1.msra.mxu0 0.0
        %1479 = vmatprep.subr.mxu0 0.0
        %1480 = vmatpush1.msra.mxu0 0.0
        %1481 = vmatprep.subr.mxu0 0.0
        %1482 = vmatpush1.msra.mxu0 0.0
        %1483 = vmatprep.subr.mxu0 0.0
        %1484 = vmatpush1.msra.mxu0 0.0
        %1485 = vmatprep.subr.mxu0 0.0
        %1486 = vmatpush1.msra.mxu0 0.0
        %1487 = vmatprep.subr.mxu0 0.0
        %1488 = vmatpush1.msra.mxu0 0.0
        %1489 = vmatprep.subr.mxu0 0.0
        %1490 = vmatpush1.msra.mxu0 0.0
        %1491 = vmatprep.subr.mxu0 0.0
        %1492 = vmatpush1.msra.mxu0 0.0
        %1493 = vmatprep.subr.mxu0 0.0
        %1494 = vmatpush1.msra.mxu0 0.0
        %1495 = vmatprep.subr.mxu0 0.0
        %1496 = vmatpush1.msra.mxu0 0.0
        %1497 = vmatprep.subr.mxu0 0.0
        %1498 = vmatpush1.msra.mxu0 0.0
        %1499 = vmatprep.subr.mxu0 0.0
        %1500 = vmatpush1.msra.mxu0 0.0
        %1501 = vmatprep.subr.mxu0 0.0
        %1502 = vmatpush1.msra.mxu0 0.0
        %1503 = vmatprep.subr.mxu0 0.0
        %1504 = vmatpush1.msra.mxu0 0.0
        %1505 = vmatprep.subr.mxu0 0.0
        %1506 = vmatpush1.msra.mxu0 0.0
        %1507 = vmatprep.subr.mxu0 0.0
        %1508 = vmatpush1.msra.mxu0 0.0
        %1509 = vmatprep.subr.mxu0 0.0
        %1510 = vmatpush1.msra.mxu0 0.0
        %1511 = vmatprep.subr.mxu0 0.0
        %1512 = vmatpush1.msra.mxu0 0.0
        %1513 = vmatprep.subr.mxu0 0.0
        %1514 = vmatpush1.msra.mxu0 0.0
        %1515 = vmatprep.subr.mxu0 0.0
        %1516 = vmatpush1.msra.mxu0 0.0
        %1517 = vmatprep.subr.mxu0 0.0
        %1518 = vmatpush1.msra.mxu0 0.0
        %1519 = vmatprep.subr.mxu0 0.0
        %1520 = vmatpush1.msra.mxu0 0.0
        %1521 = vmatprep.subr.mxu0 0.0
        %1522 = vmatpush1.msra.mxu0 0.0
        %1523 = vmatprep.subr.mxu0 0.0
        %1524 = vmatpush1.msra.mxu0 0.0
        %1525 = vmatprep.subr.mxu0 0.0
        %1526 = vmatpush1.msra.mxu0 0.0
        %1527 = vmatprep.subr.mxu0 0.0
        %1528 = vmatpush1.msra.mxu0 0.0
        %1529 = vmatprep.subr.mxu0 0.0
        %1530 = vmatpush1.msra.mxu0 0.0
        %1531 = vmatprep.mubr.f32.mxu0 0.0
        %1532 = vmatmul.mubr.f32.gmra.mrb[0].mxu0 %v1465
        %v1533 = vpop.f32.mrb[0].mxu0
        %v1534 = vadd.f32 0.0, %v1533
        %v1535 = vpop.f32.mrb[0].mxu0
        %1536 = vdwg.mxu0
        %v1537 = vadd.f32 %v1458, %v1534
        %s1538 = scalar_lea.vmem %s5, 224
        %v1539 = vld [vmem:[%s1538] sm:$0xff]
        %v1540 = vld [vmem:[%s1538 + $0x8] sm:$0xff]
        %v1541 = vld [vmem:[%s1538 + $0x10] sm:$0xff]
        %v1542 = vld [vmem:[%s1538 + $0x18] sm:$0xff]
        %v1543 = vrot.slane %v985, 7
        %v1544 = vsel %vm649, %v1543, 0
        %1546 = vmatprep.subr.mxu0 0.0
        %1547 = vmatpush1.msra.mxu0 %v1539
        %1548 = vmatprep.subr.mxu0 0.0
        %1549 = vmatpush1.msra.mxu0 %v1540
        %1550 = vmatprep.subr.mxu0 0.0
        %1551 = vmatpush1.msra.mxu0 %v1541
        %1552 = vmatprep.subr.mxu0 0.0
        %1553 = vmatpush1.msra.mxu0 %v1542
        %1554 = vmatprep.subr.mxu0 0.0
        %1555 = vmatpush1.msra.mxu0 0.0
        %1556 = vmatprep.subr.mxu0 0.0
        %1557 = vmatpush1.msra.mxu0 0.0
        %1558 = vmatprep.subr.mxu0 0.0
        %1559 = vmatpush1.msra.mxu0 0.0
        %1560 = vmatprep.subr.mxu0 0.0
        %1561 = vmatpush1.msra.mxu0 0.0
        %1562 = vmatprep.subr.mxu0 0.0
        %1563 = vmatpush1.msra.mxu0 0.0
        %1564 = vmatprep.subr.mxu0 0.0
        %1565 = vmatpush1.msra.mxu0 0.0
        %1566 = vmatprep.subr.mxu0 0.0
        %1567 = vmatpush1.msra.mxu0 0.0
        %1568 = vmatprep.subr.mxu0 0.0
        %1569 = vmatpush1.msra.mxu0 0.0
        %1570 = vmatprep.subr.mxu0 0.0
        %1571 = vmatpush1.msra.mxu0 0.0
        %1572 = vmatprep.subr.mxu0 0.0
        %1573 = vmatpush1.msra.mxu0 0.0
        %1574 = vmatprep.subr.mxu0 0.0
        %1575 = vmatpush1.msra.mxu0 0.0
        %1576 = vmatprep.subr.mxu0 0.0
        %1577 = vmatpush1.msra.mxu0 0.0
        %1578 = vmatprep.subr.mxu0 0.0
        %1579 = vmatpush1.msra.mxu0 0.0
        %1580 = vmatprep.subr.mxu0 0.0
        %1581 = vmatpush1.msra.mxu0 0.0
        %1582 = vmatprep.subr.mxu0 0.0
        %1583 = vmatpush1.msra.mxu0 0.0
        %1584 = vmatprep.subr.mxu0 0.0
        %1585 = vmatpush1.msra.mxu0 0.0
        %1586 = vmatprep.subr.mxu0 0.0
        %1587 = vmatpush1.msra.mxu0 0.0
        %1588 = vmatprep.subr.mxu0 0.0
        %1589 = vmatpush1.msra.mxu0 0.0
        %1590 = vmatprep.subr.mxu0 0.0
        %1591 = vmatpush1.msra.mxu0 0.0
        %1592 = vmatprep.subr.mxu0 0.0
        %1593 = vmatpush1.msra.mxu0 0.0
        %1594 = vmatprep.subr.mxu0 0.0
        %1595 = vmatpush1.msra.mxu0 0.0
        %1596 = vmatprep.subr.mxu0 0.0
        %1597 = vmatpush1.msra.mxu0 0.0
        %1598 = vmatprep.subr.mxu0 0.0
        %1599 = vmatpush1.msra.mxu0 0.0
        %1600 = vmatprep.subr.mxu0 0.0
        %1601 = vmatpush1.msra.mxu0 0.0
        %1602 = vmatprep.subr.mxu0 0.0
        %1603 = vmatpush1.msra.mxu0 0.0
        %1604 = vmatprep.subr.mxu0 0.0
        %1605 = vmatpush1.msra.mxu0 0.0
        %1606 = vmatprep.subr.mxu0 0.0
        %1607 = vmatpush1.msra.mxu0 0.0
        %1608 = vmatprep.subr.mxu0 0.0
        %1609 = vmatpush1.msra.mxu0 0.0
        %1610 = vmatprep.mubr.f32.mxu0 0.0
        %1611 = vmatmul.mubr.f32.gmra.mrb[0].mxu0 %v1544
        %v1612 = vpop.f32.mrb[0].mxu0
        %v1613 = vadd.f32 0.0, %v1612
        %v1614 = vpop.f32.mrb[0].mxu0
        %1615 = vdwg.mxu0
        %v1616 = vadd.f32 %v1537, %v1613
        %v1617 = vld [vmem:[%s6] sm:$0x1]
        %v1618 = vadd.f32 %v1616, %v1617
        %vm1619 = vcmask 90112
        %1620 = vst.msk [vmem:[%s324] sm:$0x1] %vm1619, %v1618
        %s1621 = sand.u32 %s225, 1
        %s1622 = scalar_lea.sflag [#allocation3], %s1621
        %s1623 = sand.u32 %s225, 1
        %s1624 = scalar_lea.vmem [#allocation2], %s1623
        // Predicated region
        $region57: #{tpu_custom_call.1} parent=55 // pred_check
          %p1625 = pneg %p235
        $region58: #{tpu_custom_call.1} parent=55 // pred_check_branch
          %1627 = sbr.rel (%p1625) target = $region60
        $region59: #{tpu_custom_call.1} parent=55 // pred_region
          %s1629 = ssub.s32 16, 16
          %1630 = vsyncadd %s1622, %s1629
          %s1631 = smul.addr %s23, 16
          %s1632 = scalar_lea.hbm %s9, %s1631
          %s1634 = sshll.u32 %s1624, 4
          %s1635 = int_to_ptr.vmem [resolvable:$true] %s1634
          %1637 = dma.vmem_to_hbm [thread:$0]  %s1635, 16, %s1632, %s1622
        $region60: #{tpu_custom_call.1} parent=55 // pred_fallthru
          _
      $region56: #{tpu_custom_call.1} parent=5 // pred_fallthru
        _
      %p1638 = scmp.le.s32.totalorder 2, %s18
      // Predicated region
      $region61: #{tpu_custom_call.1} parent=5 // pred_check
        %p1639 = pneg %p1638
      $region62: #{tpu_custom_call.1} parent=5 // pred_check_branch
        %1641 = sbr.rel (%p1639) target = $region64
      $region63: #{tpu_custom_call.1} parent=5 // pred_region
        %s1642 = ssub.s32 %s18, 2
        // Predicated region
        $region65: #{tpu_custom_call.1} parent=63 // pred_check
          %p1643 = pneg %p241
        $region66: #{tpu_custom_call.1} parent=63 // pred_check_branch
          %1645 = sbr.rel (%p1643) target = $region68
        $region67: #{tpu_custom_call.1} parent=63 // pred_region
          %s1646 = sand.u32 %s226, 1
          %s1647 = scalar_lea.sflag [#allocation3], %s1646
          %s1648 = sand.u32 %s226, 1
          %s1649 = scalar_lea.vmem [#allocation2], %s1648
          %1650 = dma.done %s1647, 16
        $region68: #{tpu_custom_call.1} parent=63 // pred_fallthru
          _
      $region64: #{tpu_custom_call.1} parent=5 // pred_fallthru
        _
    $region6: #{tpu_custom_call.1} parent=1 // loop_footer
      %s22 = sadd.s32 1, %s18
    $region7: #{tpu_custom_call.1} parent=1 // loop_footer_branch
      %17 = sbr.rel target = $region3
    $region8: #{tpu_custom_call.1} parent=1 // loop_exit
      _
    %1651 = vsyncpa [#allocation3], 1
    %s1652 = scalar_lea.sflag [#allocation3], 1
    %1653 = vsyncpa %s1652, 1

</llo_original>
